<compile_context>
chip_gen: v6e
topology: v6e:2x2x1
jax: 0.10.0
libtpu: 0.0.40
codegen_flags: <defaults>
</compile_context>

<pallas_src>
import functools
import math

import jax
import jax.numpy as jnp
from jax import lax
from jax.experimental import pallas as pl
from jax.experimental.pallas import tpu as pltpu

LANE = 128
SUBLANE = 8
VMEM_LIMIT = 64 * 1024 * 1024  # safe scoped-VMEM ceiling on v5e / v6e / v7x


# ------------------------------ small helpers ------------------------------

def _round_up(x, m):
    return ((x + m - 1) // m) * m


def _row_tile(n, target):
    """Largest power-of-two tile <= target (>=8) dividing n, else full n."""
    t = target
    while t >= SUBLANE:
        if n % t == 0:
            return t
        t //= 2
    return n


def _lane_tile(n, target):
    """Largest power-of-two tile <= target (>=128) dividing n, else full n."""
    t = target
    while t >= LANE:
        if n % t == 0:
            return t
        t //= 2
    return n


def _par_row_tile(n, target):
    """Row tile for 'parallel' row grids: keep >= 2 row blocks when possible
    so both v7x TensorCores get work, otherwise biggest divisor <= target."""
    return _row_tile(n, min(target, max(n // 2, SUBLANE)))


def _pad2(a, rows, cols):
    return jnp.pad(a, ((0, rows - a.shape[0]), (0, cols - a.shape[1])))


def _pad1(a, cols):
    return jnp.pad(a, (0, cols - a.shape[0]))


def _mosaic(*sem):
    return pltpu.CompilerParams(dimension_semantics=sem,
                                vmem_limit_bytes=VMEM_LIMIT)


# -------------------- kernel 1: input MLP + W1/W2 projections ----------------

def _mlp_proj_kernel(x_ref, wi_ref, bi_ref, wh_ref, bh_ref, w1_ref, w2_ref,
                     h_ref, xp1_ref, xp2_ref):
    # lin_in + ReLU (+ dropout identity in eval) + lin_hid + ReLU, then W1/W2 projections;
    # the (tm, H) intermediate never leaves VMEM.
    h1 = jnp.dot(x_ref[...], wi_ref[...], preferred_element_type=jnp.float32) + bi_ref[...]
    h1 = jnp.maximum(h1, 0.0)
    h2 = jnp.dot(h1, wh_ref[...], preferred_element_type=jnp.float32) + bh_ref[...]
    h2 = jnp.maximum(h2, 0.0)
    h_ref[...] = h2.astype(h_ref.dtype)
    xp1_ref[...] = jnp.dot(h2, w1_ref[...],
                           preferred_element_type=jnp.float32).astype(xp1_ref.dtype)
    xp2_ref[...] = jnp.dot(h2, w2_ref[...],
                           preferred_element_type=jnp.float32).astype(xp2_ref.dtype)


def mlp_and_project(x, wi, bi, wh, bh, w1, w2, *, row_tile=256):
    n, fin = x.shape
    hp = wi.shape[1]
    tm = _par_row_tile(n, row_tile)

    def resident(shape):
        return pl.BlockSpec(shape, lambda i: (0, 0))

    return pl.pallas_call(
        _mlp_proj_kernel,
        out_shape=(jax.ShapeDtypeStruct((n, hp), jnp.bfloat16),) * 3,
        grid=(n // tm,),
        in_specs=[pl.BlockSpec((tm, fin), lambda i: (i, 0)),
                  resident((fin, hp)), resident((1, hp)),
                  resident((hp, hp)), resident((1, hp)),
                  resident((hp, hp)), resident((hp, hp))],
        out_specs=(pl.BlockSpec((tm, hp), lambda i: (i, 0)),) * 3,
        compiler_params=_mosaic("parallel"),
    )(x, wi, bi.reshape(1, hp), wh, bh.reshape(1, hp), w1, w2)


# ------------- kernel 2: adjacency power + fused (diff > 0) mask -------------

def _power_mask_kernel(a_ref, b_ref, prev_ref, pow_ref, mask_ref, acc_ref):
    @pl.when(pl.program_id(2) == 0)
    def _():
        acc_ref[...] = jnp.zeros_like(acc_ref)

    # Exact 2-pass matmul: LHS (f32 walk counts) split into bf16 hi/lo; RHS (base
    # adjacency) is already bf16 and exactly representable (integer counts <= 256).
    # Exact for LHS counts < ~2^17 and f32 accumulation < 2^24.
    a = a_ref[...]
    a_hi = a.astype(jnp.bfloat16)
    a_lo = (a - a_hi.astype(jnp.float32)).astype(jnp.bfloat16)
    b = b_ref[...]
    acc_ref[...] += (jnp.dot(a_hi, b, preferred_element_type=jnp.float32) +
                     jnp.dot(a_lo, b, preferred_element_type=jnp.float32))

    # store (and fused neighbour mask) only on the final reduction step
    @pl.when(pl.program_id(2) == pl.num_programs(2) - 1)
    def _():
        acc = acc_ref[...]
        pow_ref[...] = acc
        mask_ref[...] = ((acc - prev_ref[...]) > 0.0).astype(mask_ref.dtype)


def power_and_mask(a_prev, a_base_bf, *, tile=512):
    """Returns (a_prev @ A) in f32 and the bf16 0/1 mask (a_prev@A - a_prev) > 0."""
    n = a_prev.shape[0]
    tm = _row_tile(n, tile)
    tn = _lane_tile(n, tile)
    tk = _lane_tile(n, tile)
    return pl.pallas_call(
        _power_mask_kernel,
        out_shape=(jax.ShapeDtypeStruct((n, n), jnp.float32),
                   jax.ShapeDtypeStruct((n, n), jnp.bfloat16)),
        grid=(n // tm, n // tn, n // tk),
        in_specs=[pl.BlockSpec((tm, tk), lambda i, j, l: (i, l)),   # A^(k-1) (LHS)
                  pl.BlockSpec((tk, tn), lambda i, j, l: (l, j)),   # A (bf16 RHS)
                  pl.BlockSpec((tm, tn), lambda i, j, l: (i, j))],  # A^(k-1) (mask epilogue)
        out_specs=(pl.BlockSpec((tm, tn), lambda i, j, l: (i, j)),
                   pl.BlockSpec((tm, tn), lambda i, j, l: (i, j))),
        scratch_shapes=[pltpu.VMEM((tm, tn), jnp.float32)],
        compiler_params=_mosaic("parallel", "parallel", "arbitrary"),
    )(a_prev, a_base_bf, a_prev)


# -------- kernel 3: merged LCS (all hops): top-k filter + softmax + agg -------

def _lcs_kernel(*refs, num_hops, mk_list, scale):
    xp1_ref, xp2_ref, h_ref = refs[0], refs[1], refs[2]
    mask_refs = refs[3:3 + num_hops]
    out_refs = refs[3 + num_hops:]
    filt_refs = out_refs[:num_hops]
    sm_refs = out_refs[num_hops:2 * num_hops]
    feat_refs = out_refs[2 * num_hops:]

    neg = jnp.float32(-jnp.inf)

    # scores[i, j] = <W1 x_i, W2 x_j> / sqrt(H_true); contraction over the last dims
    # of both operands (no explicit xp2^T).  Computed ONCE and shared by every hop.
    scores = lax.dot_general(
        xp1_ref[...], xp2_ref[...],
        dimension_numbers=(((1,), (1,)), ((), ())),
        preferred_element_type=jnp.float32) * scale
    h = h_ref[...]

    for t in range(num_hops):
        mask = mask_refs[t][...] > 0.0          # bf16 0/1 -> bool
        masked = jnp.where(mask, scores, neg)

        # per-row mk-th largest value via unrolled max-removal (mk is static).
        # Rows with fewer than mk neighbours decay thr to -inf -> all neighbours kept
        # (matches torch k = min(mk, num_neighbors)).  Ties at the threshold keep all
        # tied neighbours (torch.topk keeps exactly k) -- accepted approximation.
        cur = masked
        thr = jnp.max(cur, axis=-1, keepdims=True)
        for _ in range(mk_list[t] - 1):
            cur = jnp.where(cur >= thr, neg, cur)
            thr = jnp.max(cur, axis=-1, keepdims=True)
        filt = jnp.where(mask & (masked >= thr), 1.0, 0.0)
        filt_refs[t][...] = filt.astype(filt_refs[t].dtype)   # bf16, exactly 0/1

        # row softmax over ALL valid neighbours; rows w/o neighbours stay zero
        # (matches the torch loop which skips such rows).
        row_max = jnp.max(masked, axis=-1, keepdims=True)
        safe_max = jnp.where(row_max > neg, row_max, 0.0)
        e = jnp.where(mask, jnp.exp(masked - safe_max), 0.0)
        denom = jnp.sum(e, axis=-1, keepdims=True)
        sm_refs[t][...] = (e / jnp.where(denom > 0.0, denom, 1.0)).astype(sm_refs[t].dtype)

        # fused high-order aggregation for this hop: Ak_filter @ h
        feat_refs[t][...] = jnp.dot(filt.astype(jnp.bfloat16), h,
                                    preferred_element_type=jnp.float32)


def lcs_topk_agg(xp1, xp2, h, masks, mk_list, hidden_true, *, row_tile=256):
    n, hp = xp1.shape
    num_hops = len(masks)
    tq = _par_row_tile(n, row_tile)

    kern = functools.partial(_lcs_kernel, num_hops=num_hops,
                             mk_list=tuple(int(m) for m in mk_list),
                             scale=1.0 / math.sqrt(hidden_true))
    row_nn = pl.BlockSpec((tq, n), lambda i: (i, 0))
    row_nh = pl.BlockSpec((tq, hp), lambda i: (i, 0))
    resident = pl.BlockSpec((n, hp), lambda i: (0, 0))

    out_shape = (tuple(jax.ShapeDtypeStruct((n, n), jnp.bfloat16) for _ in range(num_hops))
                 + tuple(jax.ShapeDtypeStruct((n, n), jnp.float32) for _ in range(num_hops))
                 + tuple(jax.ShapeDtypeStruct((n, hp), jnp.float32) for _ in range(num_hops)))
    out_specs = (tuple(row_nn for _ in range(num_hops))
                 + tuple(row_nn for _ in range(num_hops))
                 + tuple(row_nh for _ in range(num_hops)))

    results = pl.pallas_call(
        kern,
        out_shape=out_shape,
        grid=(n // tq,),
        in_specs=[row_nh, resident, resident] + [row_nn for _ in range(num_hops)],
        out_specs=out_specs,
        compiler_params=_mosaic("parallel"),
    )(xp1, xp2, h, *masks)

    filts = results[:num_hops]
    sms = results[num_hops:2 * num_hops]
    feats = results[2 * num_hops:]
    return filts, sms, feats


# ----- kernel 4: fused epilogue (hop0/low agg + linears + fusion + classifier) -----

def _epilogue_kernel(*refs, num_hops):
    alpha_ref, beta_ref, a_ref, a2_ref, h_ref = refs[:5]
    feat_refs = refs[5:5 + num_hops]
    (wl_ref, bl_ref, wh_ref, bh_ref, wc_ref, bc_ref, o_ref) = refs[5 + num_hops:]

    h = h_ref[...]

    # hop-0 feature: A @ h (bf16 adjacency, exact for counts <= 256)
    hop0 = jnp.dot(a_ref[...], h, preferred_element_type=jnp.float32)
    high_pre = alpha_ref[0] * hop0
    for t in range(num_hops):
        high_pre = high_pre + alpha_ref[t + 1] * feat_refs[t][...]
    high = jnp.dot(high_pre, wh_ref[...], preferred_element_type=jnp.float32) + bh_ref[...]
    high = jnp.maximum(high, 0.0)

    # low path: A^2 @ h then low_linear + ReLU
    low_pre = jnp.dot(a2_ref[...], h, preferred_element_type=jnp.float32)
    low = jnp.dot(low_pre, wl_ref[...], preferred_element_type=jnp.float32) + bl_ref[...]
    low = jnp.maximum(low, 0.0)

    # beta fusion + classifier (dropout identity in eval mode)
    beta = beta_ref[0]
    fused = beta * low + (1.0 - beta) * high
    o_ref[...] = (jnp.dot(fused, wc_ref[...], preferred_element_type=jnp.float32)
                  + bc_ref[...]).astype(o_ref.dtype)


def fused_epilogue(alpha, beta, a_bf, a2_bf, h, hop_feats,
                   w_low, b_low, w_high, b_high, w_cls, b_cls, *, row_tile=256):
    n, hp = h.shape
    out = w_cls.shape[1]
    num_hops = len(hop_feats)
    tq = _par_row_tile(n, row_tile)

    smem = pl.BlockSpec(memory_space=pltpu.MemorySpace.SMEM)
    row_nn = pl.BlockSpec((tq, n), lambda i: (i, 0))
    row_nh = pl.BlockSpec((tq, hp), lambda i: (i, 0))
    res_hh = pl.BlockSpec((hp, hp), lambda i: (0, 0))
    res_1h = pl.BlockSpec((1, hp), lambda i: (0, 0))

    in_specs = ([smem, smem, row_nn, row_nn, pl.BlockSpec((n, hp), lambda i: (0, 0))]
                + [row_nh for _ in range(num_hops)]
                + [res_hh, res_1h, res_hh, res_1h,
                   pl.BlockSpec((hp, out), lambda i: (0, 0)),
                   pl.BlockSpec((1, out), lambda i: (0, 0))])

    return pl.pallas_call(
        functools.partial(_epilogue_kernel, num_hops=num_hops),
        out_shape=jax.ShapeDtypeStruct((n, out), jnp.float32),
        grid=(n // tq,),
        in_specs=in_specs,
        out_specs=pl.BlockSpec((tq, out), lambda i: (i, 0)),
        compiler_params=_mosaic("parallel"),
    )(alpha, beta, a_bf, a2_bf, h, *hop_feats,
      w_low, b_low.reshape(1, hp), w_high, b_high.reshape(1, hp),
      w_cls, b_cls.reshape(1, out))


# --------------------------------- forward ----------------------------------

def scalegnn_forward(x, edge_index, params, *, num_layers, max_k):
    assert num_layers >= 2, "reference forward indexes As[1] (needs >= 2 layers)"
    n, in_dim = x.shape
    hidden = params["lin_in_w"].shape[1]
    out_dim = params["cls_w"].shape[1]

    fp = _round_up(in_dim, LANE)
    hp = _round_up(hidden, LANE)
    op = _round_up(out_dim, LANE)

    # zero-pad feature dims to lane-dense widths (padded lanes stay exactly 0)
    x_p = _pad2(x, n, fp)
    wi = _pad2(params["lin_in_w"], fp, hp);   bi = _pad1(params["lin_in_b"], hp)
    wh = _pad2(params["lin_hid_w"], hp, hp);  bh = _pad1(params["lin_hid_b"], hp)
    w1 = _pad2(params["W1"], hp, hp)
    w2 = _pad2(params["W2"], hp, hp)
    w_low = _pad2(params["low_w"], hp, hp);   b_low = _pad1(params["low_b"], hp)
    w_high = _pad2(params["high_w"], hp, hp); b_high = _pad1(params["high_b"], hp)
    w_cls = _pad2(params["cls_w"], hp, op);   b_cls = _pad1(params["cls_b"], op)

    # fused input MLP (+ReLU; dropout identity in eval) and W1/W2 projections, bf16 out
    h, xp1, xp2 = mlp_and_project(x_p, wi, bi, wh, bh, w1, w2)

    alpha = jax.nn.softmax(params["alpha_raw"])                 # (K,) tiny glue

    # mk is static: topk_logit is the fixed constant 1.5 per layer (as in __init__)
    sig = 1.0 / (1.0 + math.exp(-float(params["topk_logit_const"])))
    mk_val = int(min(max(round(max_k * sig), 1), max_k))
    mk_list = [mk_val] * num_layers

    # dense 1-hop adjacency (walk counts) + bf16 copy (exact: counts <= 256)
    A = jnp.zeros((n, n), jnp.float32).at[edge_index[0], edge_index[1]].add(1.0)
    A_bf = A.astype(jnp.bfloat16)

    # adjacency power chain with fused (A^k - A^(k-1)) > 0 mask epilogue (bf16 masks)
    As = [A]
    masks = []
    for _ in range(1, num_layers):
        nxt, m = power_and_mask(As[-1], A_bf)
        As.append(nxt)
        masks.append(m)

    # merged LCS pass: one pallas_call handles every hop >= 1
    filts, sms, feats = lcs_topk_agg(xp1, xp2, h, masks, mk_list[1:], hidden)

    # fused epilogue: hop-0 agg, low path A^2 @ h, alpha sum, linears, beta fusion, classifier
    a2_bf = As[1].astype(jnp.bfloat16)  # counts > 256 would round (accepted bf16 approximation)
    logits_p = fused_epilogue(alpha, params["beta"], A_bf, a2_bf, h, list(feats),
                              w_low, b_low, w_high, b_high, w_cls, b_cls)
    logits = logits_p[:, :out_dim]

    filters = [A] + list(filts)          # hop 0 keeps the raw 1-hop adjacency (as in torch)
    lcs_scores = [None] + list(sms)
    return logits, lcs_scores, filters, mk_list, [float(a) for a in alpha]


# ------------------------------- parameters ---------------------------------

def init_params(key, in_dim, hidden, out_dim, num_layers):
    ks = jax.random.split(key, 13)

    def w(k, i, o):
        return 0.1 * jax.random.normal(k, (i, o), jnp.float32)

    def b(k, o):
        return 0.1 * jax.random.normal(k, (o,), jnp.float32)

    return {
        "lin_in_w": w(ks[0], in_dim, hidden), "lin_in_b": b(ks[1], hidden),
        "lin_hid_w": w(ks[2], hidden, hidden), "lin_hid_b": b(ks[3], hidden),
        "low_w": w(ks[4], hidden, hidden), "low_b": b(ks[5], hidden),
        "high_w": w(ks[6], hidden, hidden), "high_b": b(ks[7], hidden),
        "cls_w": w(ks[8], hidden, out_dim), "cls_b": b(ks[9], out_dim),
        "W1": w(ks[10], hidden, hidden), "W2": w(ks[11], hidden, hidden),
        "alpha_raw": jax.random.normal(ks[12], (num_layers,), jnp.float32),
        "topk_logit_const": 1.5,                 # nn.Parameter(ones(K) * 1.5)
        "beta": jnp.array([0.5], jnp.float32),   # nn.Parameter(0.5)
    }


# ----------------------------------- main ------------------------------------

if __name__ == "__main__":
    N, IN_DIM, HIDDEN, OUT_DIM = 256, 16, 32, 8
    NUM_LAYERS, MAX_K, E = 3, 4, 1024

    key = jax.random.PRNGKey(0)
    k_x, k_src, k_dst, k_par = jax.random.split(key, 4)

    x = jax.random.normal(k_x, (N, IN_DIM), jnp.float32)
    src = jax.random.randint(k_src, (E,), 0, N)
    dst = jax.random.randint(k_dst, (E,), 0, N)
    edge_index = jnp.stack([src, dst], axis=0)  # [2, E]

    params = init_params(k_par, IN_DIM, HIDDEN, OUT_DIM, NUM_LAYERS)

    # TODO(synk): the sparse batch_params / torch_sparse NeighborLoader path is not
    # implemented; this covers the dense edge_index forward path in eval mode.
    logits, lcs_scores, ak_filters, mk_list, alpha = scalegnn_forward(
        x, edge_index, params, num_layers=NUM_LAYERS, max_k=MAX_K)

    jax.block_until_ready(logits)
    for f in ak_filters:
        jax.block_until_ready(f)
    for s in lcs_scores:
        if s is not None:
            jax.block_until_ready(s)

    print("KERNEL_OK")
</pallas_src>

<mosaic_0001>
module attributes {stable_mosaic.version = 11 : i64} {
  func.func @_mlp_proj_kernel(%arg0: i32, %arg1: memref<128x128xf32, #tpu.memory_space<vmem>>, %arg2: memref<128x128xf32, #tpu.memory_space<vmem>>, %arg3: memref<1x128xf32, #tpu.memory_space<vmem>>, %arg4: memref<128x128xf32, #tpu.memory_space<vmem>>, %arg5: memref<1x128xf32, #tpu.memory_space<vmem>>, %arg6: memref<128x128xf32, #tpu.memory_space<vmem>>, %arg7: memref<128x128xf32, #tpu.memory_space<vmem>>, %arg8: memref<128x128xbf16, #tpu.memory_space<vmem>>, %arg9: memref<128x128xbf16, #tpu.memory_space<vmem>>, %arg10: memref<128x128xbf16, #tpu.memory_space<vmem>>) attributes {dimension_semantics = [#tpu.dimension_semantics<parallel>], iteration_bounds = array<i64: 2>, scalar_prefetch = 0 : i64, scratch_operands = 0 : i64, tpu.core_type = #tpu.core_type<tc>, window_params = [{transform_indices = @transform_0, window_bounds = array<i64: 128, 128>}, {pipeline_mode = #tpu.pipeline_mode<synchronous>, transform_indices = @transform_1, window_bounds = array<i64: 128, 128>}, {pipeline_mode = #tpu.pipeline_mode<synchronous>, transform_indices = @transform_2, window_bounds = array<i64: 1, 128>}, {pipeline_mode = #tpu.pipeline_mode<synchronous>, transform_indices = @transform_3, window_bounds = array<i64: 128, 128>}, {pipeline_mode = #tpu.pipeline_mode<synchronous>, transform_indices = @transform_4, window_bounds = array<i64: 1, 128>}, {pipeline_mode = #tpu.pipeline_mode<synchronous>, transform_indices = @transform_5, window_bounds = array<i64: 128, 128>}, {pipeline_mode = #tpu.pipeline_mode<synchronous>, transform_indices = @transform_6, window_bounds = array<i64: 128, 128>}, {transform_indices = @transform_7, window_bounds = array<i64: 128, 128>}, {transform_indices = @transform_8, window_bounds = array<i64: 128, 128>}, {transform_indices = @transform_9, window_bounds = array<i64: 128, 128>}]} {
    %c0 = arith.constant 0 : index
    %c0_0 = arith.constant 0 : index
    %0 = vector.load %arg1[%c0, %c0_0] : memref<128x128xf32, #tpu.memory_space<vmem>>, vector<128x128xf32>
    %c0_1 = arith.constant 0 : index
    %c0_2 = arith.constant 0 : index
    %1 = vector.load %arg2[%c0_1, %c0_2] : memref<128x128xf32, #tpu.memory_space<vmem>>, vector<128x128xf32>
    %cst = arith.constant dense<0.000000e+00> : vector<128x128xf32>
    %2 = tpu.matmul %0, %1, %cst {dimension_numbers = #tpu.dot_dimension_numbers<[1], [0], [0], [1], [0, 0, 1, 1], [], []>} : vector<128x128xf32>, vector<128x128xf32>, vector<128x128xf32> -> vector<128x128xf32>
    %c0_3 = arith.constant 0 : index
    %c0_4 = arith.constant 0 : index
    %3 = vector.load %arg3[%c0_3, %c0_4] : memref<1x128xf32, #tpu.memory_space<vmem>>, vector<1x128xf32>
    %4 = vector.broadcast %3 : vector<1x128xf32> to vector<128x128xf32>
    %5 = arith.addf %2, %4 : vector<128x128xf32>
    %cst_5 = arith.constant 0.000000e+00 : f32
    %6 = vector.broadcast %cst_5 : f32 to vector<128x128xf32>
    %7 = arith.maximumf %5, %6 : vector<128x128xf32>
    %c0_6 = arith.constant 0 : index
    %c0_7 = arith.constant 0 : index
    %8 = vector.load %arg4[%c0_6, %c0_7] : memref<128x128xf32, #tpu.memory_space<vmem>>, vector<128x128xf32>
    %cst_8 = arith.constant dense<0.000000e+00> : vector<128x128xf32>
    %9 = tpu.matmul %7, %8, %cst_8 {dimension_numbers = #tpu.dot_dimension_numbers<[1], [0], [0], [1], [0, 0, 1, 1], [], []>} : vector<128x128xf32>, vector<128x128xf32>, vector<128x128xf32> -> vector<128x128xf32>
    %c0_9 = arith.constant 0 : index
    %c0_10 = arith.constant 0 : index
    %10 = vector.load %arg5[%c0_9, %c0_10] : memref<1x128xf32, #tpu.memory_space<vmem>>, vector<1x128xf32>
    %11 = vector.broadcast %10 : vector<1x128xf32> to vector<128x128xf32>
    %12 = arith.addf %9, %11 : vector<128x128xf32>
    %cst_11 = arith.constant 0.000000e+00 : f32
    %13 = vector.broadcast %cst_11 : f32 to vector<128x128xf32>
    %14 = arith.maximumf %12, %13 : vector<128x128xf32>
    %15 = arith.truncf %14 : vector<128x128xf32> to vector<128x128xbf16>
    %c0_12 = arith.constant 0 : index
    %c0_13 = arith.constant 0 : index
    %16 = vector.load %arg8[%c0_12, %c0_13] : memref<128x128xbf16, #tpu.memory_space<vmem>>, vector<128x128xbf16>
    tpu.vector_store %arg8[%c0_12, %c0_13], %15 {strides = array<i32>} : memref<128x128xbf16, #tpu.memory_space<vmem>>, vector<128x128xbf16>,
    %c0_14 = arith.constant 0 : index
    %c0_15 = arith.constant 0 : index
    %17 = vector.load %arg6[%c0_14, %c0_15] : memref<128x128xf32, #tpu.memory_space<vmem>>, vector<128x128xf32>
    %cst_16 = arith.constant dense<0.000000e+00> : vector<128x128xf32>
    %18 = tpu.matmul %14, %17, %cst_16 {dimension_numbers = #tpu.dot_dimension_numbers<[1], [0], [0], [1], [0, 0, 1, 1], [], []>} : vector<128x128xf32>, vector<128x128xf32>, vector<128x128xf32> -> vector<128x128xf32>
    %19 = arith.truncf %18 : vector<128x128xf32> to vector<128x128xbf16>
    %c0_17 = arith.constant 0 : index
    %c0_18 = arith.constant 0 : index
    %20 = vector.load %arg9[%c0_17, %c0_18] : memref<128x128xbf16, #tpu.memory_space<vmem>>, vector<128x128xbf16>
    tpu.vector_store %arg9[%c0_17, %c0_18], %19 {strides = array<i32>} : memref<128x128xbf16, #tpu.memory_space<vmem>>, vector<128x128xbf16>,
    %c0_19 = arith.constant 0 : index
    %c0_20 = arith.constant 0 : index
    %21 = vector.load %arg7[%c0_19, %c0_20] : memref<128x128xf32, #tpu.memory_space<vmem>>, vector<128x128xf32>
    %cst_21 = arith.constant dense<0.000000e+00> : vector<128x128xf32>
    %22 = tpu.matmul %14, %21, %cst_21 {dimension_numbers = #tpu.dot_dimension_numbers<[1], [0], [0], [1], [0, 0, 1, 1], [], []>} : vector<128x128xf32>, vector<128x128xf32>, vector<128x128xf32> -> vector<128x128xf32>
    %23 = arith.truncf %22 : vector<128x128xf32> to vector<128x128xbf16>
    %c0_22 = arith.constant 0 : index
    %c0_23 = arith.constant 0 : index
    %24 = vector.load %arg10[%c0_22, %c0_23] : memref<128x128xbf16, #tpu.memory_space<vmem>>, vector<128x128xbf16>
    tpu.vector_store %arg10[%c0_22, %c0_23], %23 {strides = array<i32>} : memref<128x128xbf16, #tpu.memory_space<vmem>>, vector<128x128xbf16>,
    return
  }
  func.func @transform_0(%arg0: i32) -> (i32, i32) {
    %c0_i32 = arith.constant 0 : i32
    %c0_i32_0 = arith.constant 0 : i32
    return %arg0, %c0_i32 : i32, i32
  }
  func.func @transform_1(%arg0: i32) -> (i32, i32) {
    %c0_i32 = arith.constant 0 : i32
    %c0_i32_0 = arith.constant 0 : i32
    %c0_i32_1 = arith.constant 0 : i32
    return %c0_i32, %c0_i32_0 : i32, i32
  }
  func.func @transform_2(%arg0: i32) -> (i32, i32) {
    %c0_i32 = arith.constant 0 : i32
    %c0_i32_0 = arith.constant 0 : i32
    %c0_i32_1 = arith.constant 0 : i32
    return %c0_i32, %c0_i32_0 : i32, i32
  }
  func.func @transform_3(%arg0: i32) -> (i32, i32) {
    %c0_i32 = arith.constant 0 : i32
    %c0_i32_0 = arith.constant 0 : i32
    %c0_i32_1 = arith.constant 0 : i32
    return %c0_i32, %c0_i32_0 : i32, i32
  }
  func.func @transform_4(%arg0: i32) -> (i32, i32) {
    %c0_i32 = arith.constant 0 : i32
    %c0_i32_0 = arith.constant 0 : i32
    %c0_i32_1 = arith.constant 0 : i32
    return %c0_i32, %c0_i32_0 : i32, i32
  }
  func.func @transform_5(%arg0: i32) -> (i32, i32) {
    %c0_i32 = arith.constant 0 : i32
    %c0_i32_0 = arith.constant 0 : i32
    %c0_i32_1 = arith.constant 0 : i32
    return %c0_i32, %c0_i32_0 : i32, i32
  }
  func.func @transform_6(%arg0: i32) -> (i32, i32) {
    %c0_i32 = arith.constant 0 : i32
    %c0_i32_0 = arith.constant 0 : i32
    %c0_i32_1 = arith.constant 0 : i32
    return %c0_i32, %c0_i32_0 : i32, i32
  }
  func.func @transform_7(%arg0: i32) -> (i32, i32) {
    %c0_i32 = arith.constant 0 : i32
    %c0_i32_0 = arith.constant 0 : i32
    return %arg0, %c0_i32 : i32, i32
  }
  func.func @transform_8(%arg0: i32) -> (i32, i32) {
    %c0_i32 = arith.constant 0 : i32
    %c0_i32_0 = arith.constant 0 : i32
    return %arg0, %c0_i32 : i32, i32
  }
  func.func @transform_9(%arg0: i32) -> (i32, i32) {
    %c0_i32 = arith.constant 0 : i32
    %c0_i32_0 = arith.constant 0 : i32
    return %arg0, %c0_i32 : i32, i32
  }
}

</mosaic_0001>

<llo_original>
// kernel: tpu_custom_call.1
$region0: #{tpu_custom_call.1}
  #allocation0 [shape = 'u32[]', space=smem, size = 0x4, offset = 0x4, fixed_abs, tag = 'smem constant byte address 0x4 - core index']
  #allocation1 [shape = 'u32[144,128]{1,0:T(1,128)}', space=vmem, size = 0x12000, scoped, tag = 'internal scratch']
  %s0 = inlined_call_operand.hbm [shape: f32[256,128], index: 0, kind: input, shape index: {}]
  %s1 = inlined_call_operand.hbm [shape: f32[128,128], index: 1, kind: input, shape index: {}]
  %s2 = inlined_call_operand.vmem [shape: f32[1,128], index: 2, kind: input, shape index: {}]
  %s3 = inlined_call_operand.hbm [shape: f32[128,128], index: 3, kind: input, shape index: {}]
  %s4 = inlined_call_operand.vmem [shape: f32[1,128], index: 4, kind: input, shape index: {}]
  %s5 = inlined_call_operand.hbm [shape: f32[128,128], index: 5, kind: input, shape index: {}]
  %s6 = inlined_call_operand.hbm [shape: f32[128,128], index: 6, kind: input, shape index: {}]
  %s7 = inlined_call_operand.hbm [shape: bf16[256,128], index: 7, kind: output, shape index: {0}]
  %s8 = inlined_call_operand.hbm [shape: bf16[256,128], index: 8, kind: output, shape index: {1}]
  %s9 = inlined_call_operand.hbm [shape: bf16[256,128], index: 9, kind: output, shape index: {2}]
  %10 = xla_tuple %s7, %s8, %s9
  %s11 = sld [smem:[#allocation0]]
  $region97: #{tpu_custom_call.1} parent=0
    _
  %s13 = ssub.s32 1, %s11
  %s14 = scalar_select 0, %s13, %s11
  $region1: #{tpu_custom_call.1} parent=0
    #allocation2 [shape = 'u8[131072]{0}', space=vmem, size = 0x20000, scoped, tag = 'input window, operand 0']
    #allocation3 [shape = 's32[2]{0}', space=sflag, size = 0x8, scoped, tag = 'scoped memory for tpu_custom_call.1']
    #allocation4 [shape = 's32[2]{0}', space=sflag, size = 0x8, scoped, tag = 'scoped memory for tpu_custom_call.1']
    #allocation5 [shape = 'u8[65536]{0}', space=vmem, size = 0x10000, scoped, tag = 'input window, operand 1, single buffered']
    #allocation6 [shape = 's32[1]{0}', space=sflag, size = 0x4, scoped, tag = 'scoped memory for tpu_custom_call.1']
    #allocation7 [shape = 'u8[65536]{0}', space=vmem, size = 0x10000, scoped, tag = 'input window, operand 3, single buffered']
    #allocation8 [shape = 'u8[65536]{0}', space=vmem, size = 0x10000, scoped, tag = 'input window, operand 5, single buffered']
    #allocation9 [shape = 's32[1]{0}', space=sflag, size = 0x4, scoped, tag = 'scoped memory for tpu_custom_call.1']
    #allocation10 [shape = 'u8[65536]{0}', space=vmem, size = 0x10000, scoped, tag = 'input window, operand 6, single buffered']
    #allocation11 [shape = 'u8[65536]{0}', space=vmem, size = 0x10000, scoped, tag = 'output window, operand 0']
    #allocation12 [shape = 'u8[65536]{0}', space=vmem, size = 0x10000, scoped, tag = 'output window, operand 1']
    #allocation13 [shape = 's32[2]{0}', space=sflag, size = 0x8, scoped, tag = 'scoped memory for tpu_custom_call.1']
    #allocation14 [shape = 'u8[65536]{0}', space=vmem, size = 0x10000, scoped, tag = 'output window, operand 2']
    %15 = vsyncpa [#allocation3], 0
    %s16 = scalar_lea.sflag [#allocation3], 1
    %17 = vsyncpa %s16, 0
    %18 = vsyncpa [#allocation6], 0
    %19 = vsyncpa [#allocation9], 0
    %20 = vsyncpa [#allocation4], 0
    %s21 = scalar_lea.sflag [#allocation4], 1
    %22 = vsyncpa %s21, 0
    %23 = vsyncpa [#allocation13], 0
    %s24 = scalar_lea.sflag [#allocation13], 1
    %25 = vsyncpa %s24, 0
    loop: start=0, step=1, limit=4
    $region2: #{tpu_custom_call.1} parent=1 // loop_pre_header
      _
    $region3: #{tpu_custom_call.1} parent=1 // loop_header
      %s27 = sphi 0, %s31
      %p28 = scmp.ge.s32.totalorder %s27, 4
      %s37 = sphi 0, %s39
      %s40 = sphi 0, %s37
      %s41 = sphi 0, %s40
      %s57 = sphi 0, %s41
      %s61 = sphi 0, %s61
      %s63 = sphi 0, %s61
      %s64 = sphi 0, %s63
      %s78 = sphi 0, %s64
      %s82 = sphi 0, %s82
      %s84 = sphi 0, %s82
      %s85 = sphi 0, %s84
      %s99 = sphi 0, %s85
      %s103 = sphi 0, %s103
      %s105 = sphi 0, %s103
      %s106 = sphi 0, %s105
      %s120 = sphi 0, %s106
      %s124 = sphi 0, %s124
      %s126 = sphi 0, %s124
      %s127 = sphi 0, %s126
      %s141 = sphi 0, %s127
      %s145 = sphi 0, %s145
      %s147 = sphi 0, %s145
      %s148 = sphi 0, %s147
      %s162 = sphi 0, %s148
      %s166 = sphi 0, %s166
      %s168 = sphi 0, %s166
      %s169 = sphi 0, %s168
      %s183 = sphi 0, %s169
      %s189 = sphi 0, %s191
      %s192 = sphi 0, %s189
      %s193 = sphi 0, %s192
      %s209 = sphi 0, %s193
      %s215 = sphi 0, %s217
      %s218 = sphi 0, %s215
      %s219 = sphi 0, %s218
      %s235 = sphi 0, %s219
      %s241 = sphi 0, %s243
      %s244 = sphi 0, %s241
      %s245 = sphi 0, %s244
      %s261 = sphi 0, %s245
    $region4: #{tpu_custom_call.1} parent=1 // loop_header_branch
      %30 = sbr.rel (%p28) target = $region8
    $region5: #{tpu_custom_call.1} parent=1 // loop_body
      %s32 = ssub.s32 %s27, 1
      %s33 = ssub.s32 %s27, 2
      %s34 = sadd.s32 %s27, 1
      %s35 = ssub.s32 %s27, %s34
      %p36 = scmp.eq.s32.totalorder %s35, 0
      %s38 = sadd.s32 %s37, 1
      %s39 = scalar_select %p36, %s37, %s38
      %p42 = pneg %p36
      %p43 = scmp.eq.s32.totalorder %s27, 1
      %p44 = por %p42, %p43
      %p45 = scmp.ne.s32.totalorder %s37, %s40
      %p46 = scmp.eq.s32.totalorder %s27, 0
      %p47 = por %p45, %p46
      %p48 = scmp.ne.s32.totalorder %s37, %s40
      %p49 = scmp.eq.s32.totalorder %s32, 1
      %p50 = por %p48, %p49
      %p51 = scmp.ne.s32.totalorder %s40, %s41
      %p52 = scmp.eq.s32.totalorder %s32, 0
      %p53 = por %p51, %p52
      %p54 = scmp.ne.s32.totalorder %s40, %s41
      %p55 = scmp.eq.s32.totalorder %s33, 1
      %p56 = por %p54, %p55
      %p58 = scmp.ne.s32.totalorder %s41, %s57
      %p59 = scmp.eq.s32.totalorder %s33, 0
      %p60 = por %p58, %p59
      %s62 = sadd.s32 %s61, 1
      %p65 = scmp.eq.s32.totalorder %s27, 1
      %p66 = scmp.ne.s32.totalorder %s61, %s63
      %p67 = scmp.eq.s32.totalorder %s27, 0
      %p68 = por %p66, %p67
      %p69 = scmp.ne.s32.totalorder %s61, %s63
      %p70 = scmp.eq.s32.totalorder %s32, 1
      %p71 = por %p69, %p70
      %p72 = scmp.ne.s32.totalorder %s63, %s64
      %p73 = scmp.eq.s32.totalorder %s32, 0
      %p74 = por %p72, %p73
      %p75 = scmp.ne.s32.totalorder %s63, %s64
      %p76 = scmp.eq.s32.totalorder %s33, 1
      %p77 = por %p75, %p76
      %p79 = scmp.ne.s32.totalorder %s64, %s78
      %p80 = scmp.eq.s32.totalorder %s33, 0
      %p81 = por %p79, %p80
      %s83 = sadd.s32 %s82, 1
      %p86 = scmp.eq.s32.totalorder %s27, 1
      %p87 = scmp.ne.s32.totalorder %s82, %s84
      %p88 = scmp.eq.s32.totalorder %s27, 0
      %p89 = por %p87, %p88
      %p90 = scmp.ne.s32.totalorder %s82, %s84
      %p91 = scmp.eq.s32.totalorder %s32, 1
      %p92 = por %p90, %p91
      %p93 = scmp.ne.s32.totalorder %s84, %s85
      %p94 = scmp.eq.s32.totalorder %s32, 0
      %p95 = por %p93, %p94
      %p96 = scmp.ne.s32.totalorder %s84, %s85
      %p97 = scmp.eq.s32.totalorder %s33, 1
      %p98 = por %p96, %p97
      %p100 = scmp.ne.s32.totalorder %s85, %s99
      %p101 = scmp.eq.s32.totalorder %s33, 0
      %p102 = por %p100, %p101
      %s104 = sadd.s32 %s103, 1
      %p107 = scmp.eq.s32.totalorder %s27, 1
      %p108 = scmp.ne.s32.totalorder %s103, %s105
      %p109 = scmp.eq.s32.totalorder %s27, 0
      %p110 = por %p108, %p109
      %p111 = scmp.ne.s32.totalorder %s103, %s105
      %p112 = scmp.eq.s32.totalorder %s32, 1
      %p113 = por %p111, %p112
      %p114 = scmp.ne.s32.totalorder %s105, %s106
      %p115 = scmp.eq.s32.totalorder %s32, 0
      %p116 = por %p114, %p115
      %p117 = scmp.ne.s32.totalorder %s105, %s106
      %p118 = scmp.eq.s32.totalorder %s33, 1
      %p119 = por %p117, %p118
      %p121 = scmp.ne.s32.totalorder %s106, %s120
      %p122 = scmp.eq.s32.totalorder %s33, 0
      %p123 = por %p121, %p122
      %s125 = sadd.s32 %s124, 1
      %p128 = scmp.eq.s32.totalorder %s27, 1
      %p129 = scmp.ne.s32.totalorder %s124, %s126
      %p130 = scmp.eq.s32.totalorder %s27, 0
      %p131 = por %p129, %p130
      %p132 = scmp.ne.s32.totalorder %s124, %s126
      %p133 = scmp.eq.s32.totalorder %s32, 1
      %p134 = por %p132, %p133
      %p135 = scmp.ne.s32.totalorder %s126, %s127
      %p136 = scmp.eq.s32.totalorder %s32, 0
      %p137 = por %p135, %p136
      %p138 = scmp.ne.s32.totalorder %s126, %s127
      %p139 = scmp.eq.s32.totalorder %s33, 1
      %p140 = por %p138, %p139
      %p142 = scmp.ne.s32.totalorder %s127, %s141
      %p143 = scmp.eq.s32.totalorder %s33, 0
      %p144 = por %p142, %p143
      %s146 = sadd.s32 %s145, 1
      %p149 = scmp.eq.s32.totalorder %s27, 1
      %p150 = scmp.ne.s32.totalorder %s145, %s147
      %p151 = scmp.eq.s32.totalorder %s27, 0
      %p152 = por %p150, %p151
      %p153 = scmp.ne.s32.totalorder %s145, %s147
      %p154 = scmp.eq.s32.totalorder %s32, 1
      %p155 = por %p153, %p154
      %p156 = scmp.ne.s32.totalorder %s147, %s148
      %p157 = scmp.eq.s32.totalorder %s32, 0
      %p158 = por %p156, %p157
      %p159 = scmp.ne.s32.totalorder %s147, %s148
      %p160 = scmp.eq.s32.totalorder %s33, 1
      %p161 = por %p159, %p160
      %p163 = scmp.ne.s32.totalorder %s148, %s162
      %p164 = scmp.eq.s32.totalorder %s33, 0
      %p165 = por %p163, %p164
      %s167 = sadd.s32 %s166, 1
      %p170 = scmp.eq.s32.totalorder %s27, 1
      %p171 = scmp.ne.s32.totalorder %s166, %s168
      %p172 = scmp.eq.s32.totalorder %s27, 0
      %p173 = por %p171, %p172
      %p174 = scmp.ne.s32.totalorder %s166, %s168
      %p175 = scmp.eq.s32.totalorder %s32, 1
      %p176 = por %p174, %p175
      %p177 = scmp.ne.s32.totalorder %s168, %s169
      %p178 = scmp.eq.s32.totalorder %s32, 0
      %p179 = por %p177, %p178
      %p180 = scmp.ne.s32.totalorder %s168, %s169
      %p181 = scmp.eq.s32.totalorder %s33, 1
      %p182 = por %p180, %p181
      %p184 = scmp.ne.s32.totalorder %s169, %s183
      %p185 = scmp.eq.s32.totalorder %s33, 0
      %p186 = por %p184, %p185
      %s187 = ssub.s32 %s27, %s34
      %p188 = scmp.eq.s32.totalorder %s187, 0
      %s190 = sadd.s32 %s189, 1
      %s191 = scalar_select %p188, %s189, %s190
      %p194 = pneg %p188
      %p195 = scmp.eq.s32.totalorder %s27, 1
      %p196 = por %p194, %p195
      %p197 = scmp.ne.s32.totalorder %s189, %s192
      %p198 = scmp.eq.s32.totalorder %s27, 0
      %p199 = por %p197, %p198
      %p200 = scmp.ne.s32.totalorder %s189, %s192
      %p201 = scmp.eq.s32.totalorder %s32, 1
      %p202 = por %p200, %p201
      %p203 = scmp.ne.s32.totalorder %s192, %s193
      %p204 = scmp.eq.s32.totalorder %s32, 0
      %p205 = por %p203, %p204
      %p206 = scmp.ne.s32.totalorder %s192, %s193
      %p207 = scmp.eq.s32.totalorder %s33, 1
      %p208 = por %p206, %p207
      %p210 = scmp.ne.s32.totalorder %s193, %s209
      %p211 = scmp.eq.s32.totalorder %s33, 0
      %p212 = por %p210, %p211
      %s213 = ssub.s32 %s27, %s34
      %p214 = scmp.eq.s32.totalorder %s213, 0
      %s216 = sadd.s32 %s215, 1
      %s217 = scalar_select %p214, %s215, %s216
      %p220 = pneg %p214
      %p221 = scmp.eq.s32.totalorder %s27, 1
      %p222 = por %p220, %p221
      %p223 = scmp.ne.s32.totalorder %s215, %s218
      %p224 = scmp.eq.s32.totalorder %s27, 0
      %p225 = por %p223, %p224
      %p226 = scmp.ne.s32.totalorder %s215, %s218
      %p227 = scmp.eq.s32.totalorder %s32, 1
      %p228 = por %p226, %p227
      %p229 = scmp.ne.s32.totalorder %s218, %s219
      %p230 = scmp.eq.s32.totalorder %s32, 0
      %p231 = por %p229, %p230
      %p232 = scmp.ne.s32.totalorder %s218, %s219
      %p233 = scmp.eq.s32.totalorder %s33, 1
      %p234 = por %p232, %p233
      %p236 = scmp.ne.s32.totalorder %s219, %s235
      %p237 = scmp.eq.s32.totalorder %s33, 0
      %p238 = por %p236, %p237
      %s239 = ssub.s32 %s27, %s34
      %p240 = scmp.eq.s32.totalorder %s239, 0
      %s242 = sadd.s32 %s241, 1
      %s243 = scalar_select %p240, %s241, %s242
      %p246 = pneg %p240
      %p247 = scmp.eq.s32.totalorder %s27, 1
      %p248 = por %p246, %p247
      %p249 = scmp.ne.s32.totalorder %s241, %s244
      %p250 = scmp.eq.s32.totalorder %s27, 0
      %p251 = por %p249, %p250
      %p252 = scmp.ne.s32.totalorder %s241, %s244
      %p253 = scmp.eq.s32.totalorder %s32, 1
      %p254 = por %p252, %p253
      %p255 = scmp.ne.s32.totalorder %s244, %s245
      %p256 = scmp.eq.s32.totalorder %s32, 0
      %p257 = por %p255, %p256
      %p258 = scmp.ne.s32.totalorder %s244, %s245
      %p259 = scmp.eq.s32.totalorder %s33, 1
      %p260 = por %p258, %p259
      %p262 = scmp.ne.s32.totalorder %s245, %s261
      %p263 = scmp.eq.s32.totalorder %s33, 0
      %p264 = por %p262, %p263
      %p265 = scmp.le.s32.totalorder 1, %s27
      %p266 = scmp.lt.s32.totalorder %s27, 3
      %p267 = pnand %p265, %p266
      %p268 = pneg %p267
      // Predicated region
      $region9: #{tpu_custom_call.1} parent=5 // pred_check
        _
      $region10: #{tpu_custom_call.1} parent=5 // pred_check_branch
        %270 = sbr.rel (%p267) target = $region12
      $region11: #{tpu_custom_call.1} parent=5 // pred_region
        %s271 = ssub.s32 %s27, 1
        // Predicated region
        $region13: #{tpu_custom_call.1} parent=11 // pred_check
          %p272 = pneg %p74
        $region14: #{tpu_custom_call.1} parent=11 // pred_check_branch
          %274 = sbr.rel (%p272) target = $region16
        $region15: #{tpu_custom_call.1} parent=11 // pred_region
          %s276 = ssub.s32 2048, 2048
          %277 = vsyncadd [#allocation6], %s276
          %s278 = sshll.u32 [#allocation5], 4
          %s279 = int_to_ptr.vmem [resolvable:$true] %s278
          %284 = dma.hbm_to_vmem [thread:$0]  %s1, 2048, %s279, [#allocation6], 128, 128, 8
        $region16: #{tpu_custom_call.1} parent=11 // pred_fallthru
          _
        // Predicated region
        $region17: #{tpu_custom_call.1} parent=11 // pred_check
          %p285 = pneg %p95
        $region18: #{tpu_custom_call.1} parent=11 // pred_check_branch
          %287 = sbr.rel (%p285) target = $region20
        $region19: #{tpu_custom_call.1} parent=11 // pred_region
          _
        $region20: #{tpu_custom_call.1} parent=11 // pred_fallthru
          _
        // Predicated region
        $region21: #{tpu_custom_call.1} parent=11 // pred_check
          %p288 = pneg %p116
        $region22: #{tpu_custom_call.1} parent=11 // pred_check_branch
          %290 = sbr.rel (%p288) target = $region24
        $region23: #{tpu_custom_call.1} parent=11 // pred_region
          %s292 = ssub.s32 2048, 2048
          %293 = vsyncadd [#allocation6], %s292
          %s294 = sshll.u32 [#allocation7], 4
          %s295 = int_to_ptr.vmem [resolvable:$true] %s294
          %300 = dma.hbm_to_vmem [thread:$0]  %s3, 2048, %s295, [#allocation6], 128, 128, 8
        $region24: #{tpu_custom_call.1} parent=11 // pred_fallthru
          _
        // Predicated region
        $region25: #{tpu_custom_call.1} parent=11 // pred_check
          %p301 = pneg %p137
        $region26: #{tpu_custom_call.1} parent=11 // pred_check_branch
          %303 = sbr.rel (%p301) target = $region28
        $region27: #{tpu_custom_call.1} parent=11 // pred_region
          _
        $region28: #{tpu_custom_call.1} parent=11 // pred_fallthru
          _
        // Predicated region
        $region29: #{tpu_custom_call.1} parent=11 // pred_check
          %p304 = pneg %p158
        $region30: #{tpu_custom_call.1} parent=11 // pred_check_branch
          %306 = sbr.rel (%p304) target = $region32
        $region31: #{tpu_custom_call.1} parent=11 // pred_region
          %s308 = ssub.s32 2048, 2048
          %309 = vsyncadd [#allocation9], %s308
          %s310 = sshll.u32 [#allocation8], 4
          %s311 = int_to_ptr.vmem [resolvable:$true] %s310
          %316 = dma.hbm_to_vmem [thread:$0]  %s5, 2048, %s311, [#allocation9], 128, 128, 8
        $region32: #{tpu_custom_call.1} parent=11 // pred_fallthru
          _
        // Predicated region
        $region33: #{tpu_custom_call.1} parent=11 // pred_check
          %p317 = pneg %p179
        $region34: #{tpu_custom_call.1} parent=11 // pred_check_branch
          %319 = sbr.rel (%p317) target = $region36
        $region35: #{tpu_custom_call.1} parent=11 // pred_region
          %s321 = ssub.s32 2048, 2048
          %322 = vsyncadd [#allocation9], %s321
          %s323 = sshll.u32 [#allocation10], 4
          %s324 = int_to_ptr.vmem [resolvable:$true] %s323
          %329 = dma.hbm_to_vmem [thread:$0]  %s6, 2048, %s324, [#allocation9], 128, 128, 8
        $region36: #{tpu_custom_call.1} parent=11 // pred_fallthru
          _
      $region12: #{tpu_custom_call.1} parent=5 // pred_fallthru
        _
      %p330 = scmp.lt.s32.totalorder %s27, 2
      // Predicated region
      $region37: #{tpu_custom_call.1} parent=5 // pred_check
        %p331 = pneg %p330
      $region38: #{tpu_custom_call.1} parent=5 // pred_check_branch
        %333 = sbr.rel (%p331) target = $region40
      $region39: #{tpu_custom_call.1} parent=5 // pred_region
        // Predicated region
        $region41: #{tpu_custom_call.1} parent=39 // pred_check
          %p334 = pneg %p47
        $region42: #{tpu_custom_call.1} parent=39 // pred_check_branch
          %336 = sbr.rel (%p334) target = $region44
        $region43: #{tpu_custom_call.1} parent=39 // pred_region
          %s337 = sand.u32 %s37, 1
          %s338 = scalar_lea.sflag [#allocation3], %s337
          %s339 = sand.u32 %s37, 1
          %s340 = smul.addr %s339, 128
          %s341 = scalar_lea.vmem [#allocation2], %s340
          %s342 = smul.u32 16, %s27
          %s344 = ssub.s32 2048, 2048
          %345 = vsyncadd %s338, %s344
          %s346 = smul.addr %s342, 128
          %s347 = scalar_lea.hbm %s0, %s346
          %s348 = sshll.u32 %s341, 4
          %s349 = int_to_ptr.vmem [resolvable:$true] %s348
          %354 = dma.hbm_to_vmem [thread:$0]  %s347, 2048, %s349, %s338, 128, 128, 8
        $region44: #{tpu_custom_call.1} parent=39 // pred_fallthru
          _
      $region40: #{tpu_custom_call.1} parent=5 // pred_fallthru
        _
      %p355 = scmp.le.s32.totalorder 1, %s27
      %p356 = scmp.lt.s32.totalorder %s27, 3
      %p357 = pnand %p355, %p356
      %p358 = pneg %p357
      // Predicated region
      $region45: #{tpu_custom_call.1} parent=5 // pred_check
        _
      $region46: #{tpu_custom_call.1} parent=5 // pred_check_branch
        %360 = sbr.rel (%p357) target = $region48
      $region47: #{tpu_custom_call.1} parent=5 // pred_region
        %s361 = ssub.s32 %s27, 1
        %s362 = sand.u32 %s40, 1
        %s363 = scalar_lea.sflag [#allocation3], %s362
        %s364 = sand.u32 %s40, 1
        %s365 = smul.addr %s364, 128
        %s366 = scalar_lea.vmem [#allocation2], %s365
        // Predicated region
        $region49: #{tpu_custom_call.1} parent=47 // pred_check
          %p367 = pneg %p53
        $region50: #{tpu_custom_call.1} parent=47 // pred_check_branch
          %369 = sbr.rel (%p367) target = $region52
        $region51: #{tpu_custom_call.1} parent=47 // pred_region
          %370 = dma.done %s363, 2048
        $region52: #{tpu_custom_call.1} parent=47 // pred_fallthru
          _
        // Predicated region
        $region53: #{tpu_custom_call.1} parent=47 // pred_check
          %p371 = pneg %p74
        $region54: #{tpu_custom_call.1} parent=47 // pred_check_branch
          %373 = sbr.rel (%p371) target = $region56
        $region55: #{tpu_custom_call.1} parent=47 // pred_region
          %374 = dma.done [#allocation6], 2048
        $region56: #{tpu_custom_call.1} parent=47 // pred_fallthru
          _
        // Predicated region
        $region57: #{tpu_custom_call.1} parent=47 // pred_check
          %p375 = pneg %p116
        $region58: #{tpu_custom_call.1} parent=47 // pred_check_branch
          %377 = sbr.rel (%p375) target = $region60
        $region59: #{tpu_custom_call.1} parent=47 // pred_region
          %378 = dma.done [#allocation6], 2048
        $region60: #{tpu_custom_call.1} parent=47 // pred_fallthru
          _
        // Predicated region
        $region61: #{tpu_custom_call.1} parent=47 // pred_check
          %p379 = pneg %p158
        $region62: #{tpu_custom_call.1} parent=47 // pred_check_branch
          %381 = sbr.rel (%p379) target = $region64
        $region63: #{tpu_custom_call.1} parent=47 // pred_region
          %382 = dma.done [#allocation9], 2048
        $region64: #{tpu_custom_call.1} parent=47 // pred_fallthru
          _
        // Predicated region
        $region65: #{tpu_custom_call.1} parent=47 // pred_check
          %p383 = pneg %p179
        $region66: #{tpu_custom_call.1} parent=47 // pred_check_branch
          %385 = sbr.rel (%p383) target = $region68
        $region67: #{tpu_custom_call.1} parent=47 // pred_region
          %386 = dma.done [#allocation9], 2048
        $region68: #{tpu_custom_call.1} parent=47 // pred_fallthru
          _
        %s387 = sand.u32 %s40, 1
        %s388 = scalar_lea.sflag [#allocation3], %s387
        %s389 = sand.u32 %s40, 1
        %s390 = smul.addr %s389, 128
        %s391 = scalar_lea.vmem [#allocation2], %s390
        %p392 = pneg %p53
        %p393 = pneg %p50
        %p394 = pneg %p74
        %p395 = pneg %p71
        %p396 = pneg %p95
        %p397 = pneg %p92
        %p398 = pneg %p116
        %p399 = pneg %p113
        %p400 = pneg %p137
        %p401 = pneg %p134
        %p402 = pneg %p158
        %p403 = pneg %p155
        %p404 = pneg %p179
        %p405 = pneg %p176
        %p406 = pneg %p205
        %p407 = pneg %p202
        %s408 = sand.u32 %s192, 1
        %s409 = scalar_lea.sflag [#allocation4], %s408
        %s410 = sand.u32 %s192, 1
        %s411 = smul.addr %s410, 64
        %s412 = scalar_lea.vmem [#allocation11], %s411
        %p413 = pneg %p231
        %p414 = pneg %p228
        %s415 = sand.u32 %s32, 1
        %s416 = scalar_lea.sflag [#allocation13], %s415
        %s417 = sand.u32 %s218, 1
        %s418 = smul.addr %s417, 64
        %s419 = scalar_lea.vmem [#allocation12], %s418
        %p420 = pneg %p257
        %p421 = pneg %p254
        %s422 = sand.u32 %s32, 1
        %s423 = scalar_lea.sflag [#allocation13], %s422
        %s424 = sand.u32 %s244, 1
        %s425 = smul.addr %s424, 64
        %s426 = scalar_lea.vmem [#allocation14], %s425
        %s427 = smul.u32 16, %s32
        %s428 = smul.u32 16, %s32
        %s429 = smul.u32 16, %s32
        %s430 = smul.u32 16, %s32
        %v431 = vld [vmem:[%s366] sm:$0xff]
        %v432 = vld [vmem:[%s366 + $0x8] sm:$0xff]
        %v433 = vld [vmem:[%s366 + $0x10] sm:$0xff]
        %v434 = vld [vmem:[%s366 + $0x18] sm:$0xff]
        %v435 = vld [vmem:[%s366 + $0x20] sm:$0xff]
        %v436 = vld [vmem:[%s366 + $0x28] sm:$0xff]
        %v437 = vld [vmem:[%s366 + $0x30] sm:$0xff]
        %v438 = vld [vmem:[%s366 + $0x38] sm:$0xff]
        %v439 = vld [vmem:[%s366 + $0x40] sm:$0xff]
        %v440 = vld [vmem:[%s366 + $0x48] sm:$0xff]
        %v441 = vld [vmem:[%s366 + $0x50] sm:$0xff]
        %v442 = vld [vmem:[%s366 + $0x58] sm:$0xff]
        %v443 = vld [vmem:[%s366 + $0x60] sm:$0xff]
        %v444 = vld [vmem:[%s366 + $0x68] sm:$0xff]
        %v445 = vld [vmem:[%s366 + $0x70] sm:$0xff]
        %v446 = vld [vmem:[%s366 + $0x78] sm:$0xff]
        %v447 = vld [vmem:[#allocation5] sm:$0xff]
        %v448 = vld [vmem:[#allocation5 + $0x8] sm:$0xff]
        %v449 = vld [vmem:[#allocation5 + $0x10] sm:$0xff]
        %v450 = vld [vmem:[#allocation5 + $0x18] sm:$0xff]
        %v451 = vld [vmem:[#allocation5 + $0x20] sm:$0xff]
        %v452 = vld [vmem:[#allocation5 + $0x28] sm:$0xff]
        %v453 = vld [vmem:[#allocation5 + $0x30] sm:$0xff]
        %v454 = vld [vmem:[#allocation5 + $0x38] sm:$0xff]
        %v455 = vld [vmem:[#allocation5 + $0x40] sm:$0xff]
        %v456 = vld [vmem:[#allocation5 + $0x48] sm:$0xff]
        %v457 = vld [vmem:[#allocation5 + $0x50] sm:$0xff]
        %v458 = vld [vmem:[#allocation5 + $0x58] sm:$0xff]
        %v459 = vld [vmem:[#allocation5 + $0x60] sm:$0xff]
        %v460 = vld [vmem:[#allocation5 + $0x68] sm:$0xff]
        %v461 = vld [vmem:[#allocation5 + $0x70] sm:$0xff]
        %v462 = vld [vmem:[#allocation5 + $0x78] sm:$0xff]
        %v463 = vld [vmem:[%s2] sm:$0x1]
        %v465 = vlaneseq
        %v466 = vshrl.u32 %v465, 7
        %v467 = vsub.s32 0, %v466
        %v468 = vrot.slane %v463, %v467
        %470 = vmatprep.subr.mxu0 0.0
        %471 = vmatpush1.msra.mxu0 %v462
        %472 = vmatprep.subr.mxu0 0.0
        %473 = vmatpush1.msra.mxu0 %v461
        %474 = vmatprep.subr.mxu0 0.0
        %475 = vmatpush1.msra.mxu0 %v460
        %476 = vmatprep.subr.mxu0 0.0
        %477 = vmatpush1.msra.mxu0 %v459
        %478 = vmatprep.subr.mxu0 0.0
        %479 = vmatpush1.msra.mxu0 %v458
        %480 = vmatprep.subr.mxu0 0.0
        %481 = vmatpush1.msra.mxu0 %v457
        %482 = vmatprep.subr.mxu0 0.0
        %483 = vmatpush1.msra.mxu0 %v456
        %484 = vmatprep.subr.mxu0 0.0
        %485 = vmatpush1.msra.mxu0 %v455
        %486 = vmatprep.subr.mxu0 0.0
        %487 = vmatpush1.msra.mxu0 %v454
        %488 = vmatprep.subr.mxu0 0.0
        %489 = vmatpush1.msra.mxu0 %v453
        %490 = vmatprep.subr.mxu0 0.0
        %491 = vmatpush1.msra.mxu0 %v452
        %492 = vmatprep.subr.mxu0 0.0
        %493 = vmatpush1.msra.mxu0 %v451
        %494 = vmatprep.subr.mxu0 0.0
        %495 = vmatpush1.msra.mxu0 %v450
        %496 = vmatprep.subr.mxu0 0.0
        %497 = vmatpush1.msra.mxu0 %v449
        %498 = vmatprep.subr.mxu0 0.0
        %499 = vmatpush1.msra.mxu0 %v448
        %500 = vmatprep.subr.mxu0 0.0
        %501 = vmatpush1.msra.mxu0 %v447
        %502 = vmatprep.subr.mxu0 0.0
        %503 = vmatpush2.msra.mxu0 0.0
        %504 = vmatprep.subr.mxu0 0.0
        %505 = vmatpush2.msra.mxu0 0.0
        %506 = vmatprep.subr.mxu0 0.0
        %507 = vmatpush2.msra.mxu0 0.0
        %508 = vmatprep.subr.mxu0 0.0
        %509 = vmatpush2.msra.mxu0 0.0
        %510 = vmatprep.subr.mxu0 0.0
        %511 = vmatpush2.msra.mxu0 0.0
        %512 = vmatprep.subr.mxu0 0.0
        %513 = vmatpush2.msra.mxu0 0.0
        %514 = vmatprep.subr.mxu0 0.0
        %515 = vmatpush2.msra.mxu0 0.0
        %516 = vmatprep.subr.mxu0 0.0
        %517 = vmatpush2.msra.mxu0 0.0
        %518 = vmatprep.subr.mxu0 0.0
        %519 = vmatpush2.msra.mxu0 0.0
        %520 = vmatprep.subr.mxu0 0.0
        %521 = vmatpush2.msra.mxu0 0.0
        %522 = vmatprep.subr.mxu0 0.0
        %523 = vmatpush2.msra.mxu0 0.0
        %524 = vmatprep.subr.mxu0 0.0
        %525 = vmatpush2.msra.mxu0 0.0
        %526 = vmatprep.subr.mxu0 0.0
        %527 = vmatpush2.msra.mxu0 0.0
        %528 = vmatprep.subr.mxu0 0.0
        %529 = vmatpush2.msra.mxu0 0.0
        %530 = vmatprep.subr.mxu0 0.0
        %531 = vmatpush2.msra.mxu0 0.0
        %532 = vmatprep.subr.mxu0 0.0
        %533 = vmatpush2.msra.mxu0 0.0
        %534 = vmatprep.mubr.f32.mxu0 0.0
        %535 = vmatmul.mubr.f32.gmra.mxu0 %v431
        %v536 = vpop.f32.mrf.mxu0
        %v537 = vadd.f32 %v468, %v536
        %v538 = vpop.f32.mrf.mxu0
        %539 = vmatprep.mubr.f32.mxu0 0.0
        %540 = vmatmul.mubr.f32.gmra.mxu0 %v432
        %v541 = vpop.f32.mrf.mxu0
        %v542 = vadd.f32 %v468, %v541
        %v543 = vpop.f32.mrf.mxu0
        %544 = vmatprep.mubr.f32.mxu0 0.0
        %545 = vmatmul.mubr.f32.gmra.mxu0 %v433
        %v546 = vpop.f32.mrf.mxu0
        %v547 = vadd.f32 %v468, %v546
        %v548 = vpop.f32.mrf.mxu0
        %549 = vmatprep.mubr.f32.mxu0 0.0
        %550 = vmatmul.mubr.f32.gmra.mxu0 %v434
        %v551 = vpop.f32.mrf.mxu0
        %v552 = vadd.f32 %v468, %v551
        %v553 = vpop.f32.mrf.mxu0
        %554 = vmatprep.mubr.f32.mxu0 0.0
        %555 = vmatmul.mubr.f32.gmra.mxu0 %v435
        %v556 = vpop.f32.mrf.mxu0
        %v557 = vadd.f32 %v468, %v556
        %v558 = vpop.f32.mrf.mxu0
        %559 = vmatprep.mubr.f32.mxu0 0.0
        %560 = vmatmul.mubr.f32.gmra.mxu0 %v436
        %v561 = vpop.f32.mrf.mxu0
        %v562 = vadd.f32 %v468, %v561
        %v563 = vpop.f32.mrf.mxu0
        %564 = vmatprep.mubr.f32.mxu0 0.0
        %565 = vmatmul.mubr.f32.gmra.mxu0 %v437
        %v566 = vpop.f32.mrf.mxu0
        %v567 = vadd.f32 %v468, %v566
        %v568 = vpop.f32.mrf.mxu0
        %569 = vmatprep.mubr.f32.mxu0 0.0
        %570 = vmatmul.mubr.f32.gmra.mxu0 %v438
        %v571 = vpop.f32.mrf.mxu0
        %v572 = vadd.f32 %v468, %v571
        %v573 = vpop.f32.mrf.mxu0
        %574 = vmatprep.mubr.f32.mxu0 0.0
        %575 = vmatmul.mubr.f32.gmra.mxu0 %v439
        %v576 = vpop.f32.mrf.mxu0
        %v577 = vadd.f32 %v468, %v576
        %v578 = vpop.f32.mrf.mxu0
        %579 = vmatprep.mubr.f32.mxu0 0.0
        %580 = vmatmul.mubr.f32.gmra.mxu0 %v440
        %v581 = vpop.f32.mrf.mxu0
        %v582 = vadd.f32 %v468, %v581
        %v583 = vpop.f32.mrf.mxu0
        %584 = vmatprep.mubr.f32.mxu0 0.0
        %585 = vmatmul.mubr.f32.gmra.mxu0 %v441
        %v586 = vpop.f32.mrf.mxu0
        %v587 = vadd.f32 %v468, %v586
        %v588 = vpop.f32.mrf.mxu0
        %589 = vmatprep.mubr.f32.mxu0 0.0
        %590 = vmatmul.mubr.f32.gmra.mxu0 %v442
        %v591 = vpop.f32.mrf.mxu0
        %v592 = vadd.f32 %v468, %v591
        %v593 = vpop.f32.mrf.mxu0
        %594 = vmatprep.mubr.f32.mxu0 0.0
        %595 = vmatmul.mubr.f32.gmra.mxu0 %v443
        %v596 = vpop.f32.mrf.mxu0
        %v597 = vadd.f32 %v468, %v596
        %v598 = vpop.f32.mrf.mxu0
        %599 = vmatprep.mubr.f32.mxu0 0.0
        %600 = vmatmul.mubr.f32.gmra.mxu0 %v444
        %v601 = vpop.f32.mrf.mxu0
        %v602 = vadd.f32 %v468, %v601
        %v603 = vpop.f32.mrf.mxu0
        %604 = vmatprep.mubr.f32.mxu0 0.0
        %605 = vmatmul.mubr.f32.gmra.mxu0 %v445
        %v606 = vpop.f32.mrf.mxu0
        %v607 = vadd.f32 %v468, %v606
        %v608 = vpop.f32.mrf.mxu0
        %609 = vmatprep.mubr.f32.mxu0 0.0
        %610 = vmatmul.mubr.f32.gmra.mxu0 %v446
        %v611 = vpop.f32.mrf.mxu0
        %v612 = vadd.f32 %v468, %v611
        %v613 = vpop.f32.mrf.mxu0
        %614 = vdwg.mxu0
        %v615 = vmax.f32 %v537, 0.0
        %v616 = vmax.f32 %v542, 0.0
        %v617 = vmax.f32 %v547, 0.0
        %v618 = vmax.f32 %v552, 0.0
        %v619 = vmax.f32 %v557, 0.0
        %v620 = vmax.f32 %v562, 0.0
        %v621 = vmax.f32 %v567, 0.0
        %v622 = vmax.f32 %v572, 0.0
        %v623 = vmax.f32 %v577, 0.0
        %v624 = vmax.f32 %v582, 0.0
        %v625 = vmax.f32 %v587, 0.0
        %v626 = vmax.f32 %v592, 0.0
        %v627 = vmax.f32 %v597, 0.0
        %v628 = vmax.f32 %v602, 0.0
        %v629 = vmax.f32 %v607, 0.0
        %v630 = vmax.f32 %v612, 0.0
        %v631 = vld [vmem:[#allocation7] sm:$0xff]
        %v632 = vld [vmem:[#allocation7 + $0x8] sm:$0xff]
        %v633 = vld [vmem:[#allocation7 + $0x10] sm:$0xff]
        %v634 = vld [vmem:[#allocation7 + $0x18] sm:$0xff]
        %v635 = vld [vmem:[#allocation7 + $0x20] sm:$0xff]
        %v636 = vld [vmem:[#allocation7 + $0x28] sm:$0xff]
        %v637 = vld [vmem:[#allocation7 + $0x30] sm:$0xff]
        %v638 = vld [vmem:[#allocation7 + $0x38] sm:$0xff]
        %v639 = vld [vmem:[#allocation7 + $0x40] sm:$0xff]
        %v640 = vld [vmem:[#allocation7 + $0x48] sm:$0xff]
        %v641 = vld [vmem:[#allocation7 + $0x50] sm:$0xff]
        %v642 = vld [vmem:[#allocation7 + $0x58] sm:$0xff]
        %v643 = vld [vmem:[#allocation7 + $0x60] sm:$0xff]
        %v644 = vld [vmem:[#allocation7 + $0x68] sm:$0xff]
        %v645 = vld [vmem:[#allocation7 + $0x70] sm:$0xff]
        %v646 = vld [vmem:[#allocation7 + $0x78] sm:$0xff]
        %v647 = vld [vmem:[%s4] sm:$0x1]
        %v649 = vlaneseq
        %v650 = vshrl.u32 %v649, 7
        %v651 = vsub.s32 0, %v650
        %v652 = vrot.slane %v647, %v651
        %654 = vmatprep.subr.mxu0 0.0
        %655 = vmatpush1.msra.mxu0 %v646
        %656 = vmatprep.subr.mxu0 0.0
        %657 = vmatpush1.msra.mxu0 %v645
        %658 = vmatprep.subr.mxu0 0.0
        %659 = vmatpush1.msra.mxu0 %v644
        %660 = vmatprep.subr.mxu0 0.0
        %661 = vmatpush1.msra.mxu0 %v643
        %662 = vmatprep.subr.mxu0 0.0
        %663 = vmatpush1.msra.mxu0 %v642
        %664 = vmatprep.subr.mxu0 0.0
        %665 = vmatpush1.msra.mxu0 %v641
        %666 = vmatprep.subr.mxu0 0.0
        %667 = vmatpush1.msra.mxu0 %v640
        %668 = vmatprep.subr.mxu0 0.0
        %669 = vmatpush1.msra.mxu0 %v639
        %670 = vmatprep.subr.mxu0 0.0
        %671 = vmatpush1.msra.mxu0 %v638
        %672 = vmatprep.subr.mxu0 0.0
        %673 = vmatpush1.msra.mxu0 %v637
        %674 = vmatprep.subr.mxu0 0.0
        %675 = vmatpush1.msra.mxu0 %v636
        %676 = vmatprep.subr.mxu0 0.0
        %677 = vmatpush1.msra.mxu0 %v635
        %678 = vmatprep.subr.mxu0 0.0
        %679 = vmatpush1.msra.mxu0 %v634
        %680 = vmatprep.subr.mxu0 0.0
        %681 = vmatpush1.msra.mxu0 %v633
        %682 = vmatprep.subr.mxu0 0.0
        %683 = vmatpush1.msra.mxu0 %v632
        %684 = vmatprep.subr.mxu0 0.0
        %685 = vmatpush1.msra.mxu0 %v631
        %686 = vmatprep.subr.mxu0 0.0
        %687 = vmatpush2.msra.mxu0 0.0
        %688 = vmatprep.subr.mxu0 0.0
        %689 = vmatpush2.msra.mxu0 0.0
        %690 = vmatprep.subr.mxu0 0.0
        %691 = vmatpush2.msra.mxu0 0.0
        %692 = vmatprep.subr.mxu0 0.0
        %693 = vmatpush2.msra.mxu0 0.0
        %694 = vmatprep.subr.mxu0 0.0
        %695 = vmatpush2.msra.mxu0 0.0
        %696 = vmatprep.subr.mxu0 0.0
        %697 = vmatpush2.msra.mxu0 0.0
        %698 = vmatprep.subr.mxu0 0.0
        %699 = vmatpush2.msra.mxu0 0.0
        %700 = vmatprep.subr.mxu0 0.0
        %701 = vmatpush2.msra.mxu0 0.0
        %702 = vmatprep.subr.mxu0 0.0
        %703 = vmatpush2.msra.mxu0 0.0
        %704 = vmatprep.subr.mxu0 0.0
        %705 = vmatpush2.msra.mxu0 0.0
        %706 = vmatprep.subr.mxu0 0.0
        %707 = vmatpush2.msra.mxu0 0.0
        %708 = vmatprep.subr.mxu0 0.0
        %709 = vmatpush2.msra.mxu0 0.0
        %710 = vmatprep.subr.mxu0 0.0
        %711 = vmatpush2.msra.mxu0 0.0
        %712 = vmatprep.subr.mxu0 0.0
        %713 = vmatpush2.msra.mxu0 0.0
        %714 = vmatprep.subr.mxu0 0.0
        %715 = vmatpush2.msra.mxu0 0.0
        %716 = vmatprep.subr.mxu0 0.0
        %717 = vmatpush2.msra.mxu0 0.0
        %718 = vmatprep.mubr.f32.mxu0 0.0
        %719 = vmatmul.mubr.f32.gmra.mxu0 %v615
        %v720 = vpop.f32.mrf.mxu0
        %v721 = vadd.f32 %v652, %v720
        %v722 = vpop.f32.mrf.mxu0
        %723 = vmatprep.mubr.f32.mxu0 0.0
        %724 = vmatmul.mubr.f32.gmra.mxu0 %v616
        %v725 = vpop.f32.mrf.mxu0
        %v726 = vadd.f32 %v652, %v725
        %v727 = vpop.f32.mrf.mxu0
        %728 = vmatprep.mubr.f32.mxu0 0.0
        %729 = vmatmul.mubr.f32.gmra.mxu0 %v617
        %v730 = vpop.f32.mrf.mxu0
        %v731 = vadd.f32 %v652, %v730
        %v732 = vpop.f32.mrf.mxu0
        %733 = vmatprep.mubr.f32.mxu0 0.0
        %734 = vmatmul.mubr.f32.gmra.mxu0 %v618
        %v735 = vpop.f32.mrf.mxu0
        %v736 = vadd.f32 %v652, %v735
        %v737 = vpop.f32.mrf.mxu0
        %738 = vmatprep.mubr.f32.mxu0 0.0
        %739 = vmatmul.mubr.f32.gmra.mxu0 %v619
        %v740 = vpop.f32.mrf.mxu0
        %v741 = vadd.f32 %v652, %v740
        %v742 = vpop.f32.mrf.mxu0
        %743 = vmatprep.mubr.f32.mxu0 0.0
        %744 = vmatmul.mubr.f32.gmra.mxu0 %v620
        %v745 = vpop.f32.mrf.mxu0
        %v746 = vadd.f32 %v652, %v745
        %v747 = vpop.f32.mrf.mxu0
        %748 = vmatprep.mubr.f32.mxu0 0.0
        %749 = vmatmul.mubr.f32.gmra.mxu0 %v621
        %v750 = vpop.f32.mrf.mxu0
        %v751 = vadd.f32 %v652, %v750
        %v752 = vpop.f32.mrf.mxu0
        %753 = vmatprep.mubr.f32.mxu0 0.0
        %754 = vmatmul.mubr.f32.gmra.mxu0 %v622
        %v755 = vpop.f32.mrf.mxu0
        %v756 = vadd.f32 %v652, %v755
        %v757 = vpop.f32.mrf.mxu0
        %758 = vmatprep.mubr.f32.mxu0 0.0
        %759 = vmatmul.mubr.f32.gmra.mxu0 %v623
        %v760 = vpop.f32.mrf.mxu0
        %v761 = vadd.f32 %v652, %v760
        %v762 = vpop.f32.mrf.mxu0
        %763 = vmatprep.mubr.f32.mxu0 0.0
        %764 = vmatmul.mubr.f32.gmra.mxu0 %v624
        %v765 = vpop.f32.mrf.mxu0
        %v766 = vadd.f32 %v652, %v765
        %v767 = vpop.f32.mrf.mxu0
        %768 = vmatprep.mubr.f32.mxu0 0.0
        %769 = vmatmul.mubr.f32.gmra.mxu0 %v625
        %v770 = vpop.f32.mrf.mxu0
        %v771 = vadd.f32 %v652, %v770
        %v772 = vpop.f32.mrf.mxu0
        %773 = vmatprep.mubr.f32.mxu0 0.0
        %774 = vmatmul.mubr.f32.gmra.mxu0 %v626
        %v775 = vpop.f32.mrf.mxu0
        %v776 = vadd.f32 %v652, %v775
        %v777 = vpop.f32.mrf.mxu0
        %778 = vmatprep.mubr.f32.mxu0 0.0
        %779 = vmatmul.mubr.f32.gmra.mxu0 %v627
        %v780 = vpop.f32.mrf.mxu0
        %v781 = vadd.f32 %v652, %v780
        %v782 = vpop.f32.mrf.mxu0
        %783 = vmatprep.mubr.f32.mxu0 0.0
        %784 = vmatmul.mubr.f32.gmra.mxu0 %v628
        %v785 = vpop.f32.mrf.mxu0
        %v786 = vadd.f32 %v652, %v785
        %v787 = vpop.f32.mrf.mxu0
        %788 = vmatprep.mubr.f32.mxu0 0.0
        %789 = vmatmul.mubr.f32.gmra.mxu0 %v629
        %v790 = vpop.f32.mrf.mxu0
        %v791 = vadd.f32 %v652, %v790
        %v792 = vpop.f32.mrf.mxu0
        %793 = vmatprep.mubr.f32.mxu0 0.0
        %794 = vmatmul.mubr.f32.gmra.mxu0 %v630
        %v795 = vpop.f32.mrf.mxu0
        %v796 = vadd.f32 %v652, %v795
        %v797 = vpop.f32.mrf.mxu0
        %798 = vdwg.mxu0
        %v799 = vmax.f32 %v721, 0.0
        %v800 = vmax.f32 %v726, 0.0
        %v801 = vmax.f32 %v731, 0.0
        %v802 = vmax.f32 %v736, 0.0
        %v803 = vmax.f32 %v741, 0.0
        %v804 = vmax.f32 %v746, 0.0
        %v805 = vmax.f32 %v751, 0.0
        %v806 = vmax.f32 %v756, 0.0
        %v807 = vmax.f32 %v761, 0.0
        %v808 = vmax.f32 %v766, 0.0
        %v809 = vmax.f32 %v771, 0.0
        %v810 = vmax.f32 %v776, 0.0
        %v811 = vmax.f32 %v781, 0.0
        %v812 = vmax.f32 %v786, 0.0
        %v813 = vmax.f32 %v791, 0.0
        %v814 = vmax.f32 %v796, 0.0
        %v815 = vpack.c.bf16 %v800, %v799
        %v816 = vpack.c.bf16 %v802, %v801
        %v817 = vpack.c.bf16 %v804, %v803
        %v818 = vpack.c.bf16 %v806, %v805
        %v819 = vpack.c.bf16 %v808, %v807
        %v820 = vpack.c.bf16 %v810, %v809
        %v821 = vpack.c.bf16 %v812, %v811
        %v822 = vpack.c.bf16 %v814, %v813
        %v831 = vunpack.c.l.b16 %v815
        %v832 = vunpack.c.h.b16 %v815
        %v833 = vunpack.c.l.b16 %v816
        %v834 = vunpack.c.h.b16 %v816
        %v835 = vunpack.c.l.b16 %v817
        %v836 = vunpack.c.h.b16 %v817
        %v837 = vunpack.c.l.b16 %v818
        %v838 = vunpack.c.h.b16 %v818
        %v839 = vunpack.c.l.b16 %v819
        %v840 = vunpack.c.h.b16 %v819
        %v841 = vunpack.c.l.b16 %v820
        %v842 = vunpack.c.h.b16 %v820
        %v843 = vunpack.c.l.b16 %v821
        %v844 = vunpack.c.h.b16 %v821
        %v845 = vunpack.c.l.b16 %v822
        %v846 = vunpack.c.h.b16 %v822
        %v847 = vpack.c.b16 %v831, %v831
        %v848 = vpack.c.b16 %v832, %v832
        %v849 = vpack.c.b16 %v833, %v833
        %v850 = vpack.c.b16 %v834, %v834
        %v851 = vpack.c.b16 %v835, %v835
        %v852 = vpack.c.b16 %v836, %v836
        %v853 = vpack.c.b16 %v837, %v837
        %v854 = vpack.c.b16 %v838, %v838
        %v855 = vpack.c.b16 %v839, %v839
        %v856 = vpack.c.b16 %v840, %v840
        %v857 = vpack.c.b16 %v841, %v841
        %v858 = vpack.c.b16 %v842, %v842
        %v859 = vpack.c.b16 %v843, %v843
        %v860 = vpack.c.b16 %v844, %v844
        %v861 = vpack.c.b16 %v845, %v845
        %v862 = vpack.c.b16 %v846, %v846
        %879 = vst [vmem:[%s412] sm:$0xf] %v847
        %880 = vst [vmem:[%s412 + $0x4] sm:$0xf] %v848
        %881 = vst [vmem:[%s412 + $0x8] sm:$0xf] %v849
        %882 = vst [vmem:[%s412 + $0xc] sm:$0xf] %v850
        %883 = vst [vmem:[%s412 + $0x10] sm:$0xf] %v851
        %884 = vst [vmem:[%s412 + $0x14] sm:$0xf] %v852
        %885 = vst [vmem:[%s412 + $0x18] sm:$0xf] %v853
        %886 = vst [vmem:[%s412 + $0x1c] sm:$0xf] %v854
        %887 = vst [vmem:[%s412 + $0x20] sm:$0xf] %v855
        %888 = vst [vmem:[%s412 + $0x24] sm:$0xf] %v856
        %889 = vst [vmem:[%s412 + $0x28] sm:$0xf] %v857
        %890 = vst [vmem:[%s412 + $0x2c] sm:$0xf] %v858
        %891 = vst [vmem:[%s412 + $0x30] sm:$0xf] %v859
        %892 = vst [vmem:[%s412 + $0x34] sm:$0xf] %v860
        %893 = vst [vmem:[%s412 + $0x38] sm:$0xf] %v861
        %894 = vst [vmem:[%s412 + $0x3c] sm:$0xf] %v862
        %v895 = vld [vmem:[#allocation8] sm:$0xff]
        %v896 = vld [vmem:[#allocation8 + $0x8] sm:$0xff]
        %v897 = vld [vmem:[#allocation8 + $0x10] sm:$0xff]
        %v898 = vld [vmem:[#allocation8 + $0x18] sm:$0xff]
        %v899 = vld [vmem:[#allocation8 + $0x20] sm:$0xff]
        %v900 = vld [vmem:[#allocation8 + $0x28] sm:$0xff]
        %v901 = vld [vmem:[#allocation8 + $0x30] sm:$0xff]
        %v902 = vld [vmem:[#allocation8 + $0x38] sm:$0xff]
        %v903 = vld [vmem:[#allocation8 + $0x40] sm:$0xff]
        %v904 = vld [vmem:[#allocation8 + $0x48] sm:$0xff]
        %v905 = vld [vmem:[#allocation8 + $0x50] sm:$0xff]
        %v906 = vld [vmem:[#allocation8 + $0x58] sm:$0xff]
        %v907 = vld [vmem:[#allocation8 + $0x60] sm:$0xff]
        %v908 = vld [vmem:[#allocation8 + $0x68] sm:$0xff]
        %v909 = vld [vmem:[#allocation8 + $0x70] sm:$0xff]
        %v910 = vld [vmem:[#allocation8 + $0x78] sm:$0xff]
        %911 = vmatprep.subr.mxu0 0.0
        %912 = vmatpush1.msra.mxu0 %v910
        %913 = vmatprep.subr.mxu0 0.0
        %914 = vmatpush1.msra.mxu0 %v909
        %915 = vmatprep.subr.mxu0 0.0
        %916 = vmatpush1.msra.mxu0 %v908
        %917 = vmatprep.subr.mxu0 0.0
        %918 = vmatpush1.msra.mxu0 %v907
        %919 = vmatprep.subr.mxu0 0.0
        %920 = vmatpush1.msra.mxu0 %v906
        %921 = vmatprep.subr.mxu0 0.0
        %922 = vmatpush1.msra.mxu0 %v905
        %923 = vmatprep.subr.mxu0 0.0
        %924 = vmatpush1.msra.mxu0 %v904
        %925 = vmatprep.subr.mxu0 0.0
        %926 = vmatpush1.msra.mxu0 %v903
        %927 = vmatprep.subr.mxu0 0.0
        %928 = vmatpush1.msra.mxu0 %v902
        %929 = vmatprep.subr.mxu0 0.0
        %930 = vmatpush1.msra.mxu0 %v901
        %931 = vmatprep.subr.mxu0 0.0
        %932 = vmatpush1.msra.mxu0 %v900
        %933 = vmatprep.subr.mxu0 0.0
        %934 = vmatpush1.msra.mxu0 %v899
        %935 = vmatprep.subr.mxu0 0.0
        %936 = vmatpush1.msra.mxu0 %v898
        %937 = vmatprep.subr.mxu0 0.0
        %938 = vmatpush1.msra.mxu0 %v897
        %939 = vmatprep.subr.mxu0 0.0
        %940 = vmatpush1.msra.mxu0 %v896
        %941 = vmatprep.subr.mxu0 0.0
        %942 = vmatpush1.msra.mxu0 %v895
        %943 = vmatprep.subr.mxu0 0.0
        %944 = vmatpush2.msra.mxu0 0.0
        %945 = vmatprep.subr.mxu0 0.0
        %946 = vmatpush2.msra.mxu0 0.0
        %947 = vmatprep.subr.mxu0 0.0
        %948 = vmatpush2.msra.mxu0 0.0
        %949 = vmatprep.subr.mxu0 0.0
        %950 = vmatpush2.msra.mxu0 0.0
        %951 = vmatprep.subr.mxu0 0.0
        %952 = vmatpush2.msra.mxu0 0.0
        %953 = vmatprep.subr.mxu0 0.0
        %954 = vmatpush2.msra.mxu0 0.0
        %955 = vmatprep.subr.mxu0 0.0
        %956 = vmatpush2.msra.mxu0 0.0
        %957 = vmatprep.subr.mxu0 0.0
        %958 = vmatpush2.msra.mxu0 0.0
        %959 = vmatprep.subr.mxu0 0.0
        %960 = vmatpush2.msra.mxu0 0.0
        %961 = vmatprep.subr.mxu0 0.0
        %962 = vmatpush2.msra.mxu0 0.0
        %963 = vmatprep.subr.mxu0 0.0
        %964 = vmatpush2.msra.mxu0 0.0
        %965 = vmatprep.subr.mxu0 0.0
        %966 = vmatpush2.msra.mxu0 0.0
        %967 = vmatprep.subr.mxu0 0.0
        %968 = vmatpush2.msra.mxu0 0.0
        %969 = vmatprep.subr.mxu0 0.0
        %970 = vmatpush2.msra.mxu0 0.0
        %971 = vmatprep.subr.mxu0 0.0
        %972 = vmatpush2.msra.mxu0 0.0
        %973 = vmatprep.subr.mxu0 0.0
        %974 = vmatpush2.msra.mxu0 0.0
        %975 = vmatprep.mubr.f32.mxu0 0.0
        %976 = vmatmul.mubr.f32.gmra.mxu0 %v799
        %v977 = vpop.f32.mrf.mxu0
        %v978 = vadd.f32 0.0, %v977
        %v979 = vpop.f32.mrf.mxu0
        %980 = vmatprep.mubr.f32.mxu0 0.0
        %981 = vmatmul.mubr.f32.gmra.mxu0 %v800
        %v982 = vpop.f32.mrf.mxu0
        %v983 = vadd.f32 0.0, %v982
        %v984 = vpop.f32.mrf.mxu0
        %985 = vmatprep.mubr.f32.mxu0 0.0
        %986 = vmatmul.mubr.f32.gmra.mxu0 %v801
        %v987 = vpop.f32.mrf.mxu0
        %v988 = vadd.f32 0.0, %v987
        %v989 = vpop.f32.mrf.mxu0
        %990 = vmatprep.mubr.f32.mxu0 0.0
        %991 = vmatmul.mubr.f32.gmra.mxu0 %v802
        %v992 = vpop.f32.mrf.mxu0
        %v993 = vadd.f32 0.0, %v992
        %v994 = vpop.f32.mrf.mxu0
        %995 = vmatprep.mubr.f32.mxu0 0.0
        %996 = vmatmul.mubr.f32.gmra.mxu0 %v803
        %v997 = vpop.f32.mrf.mxu0
        %v998 = vadd.f32 0.0, %v997
        %v999 = vpop.f32.mrf.mxu0
        %1000 = vmatprep.mubr.f32.mxu0 0.0
        %1001 = vmatmul.mubr.f32.gmra.mxu0 %v804
        %v1002 = vpop.f32.mrf.mxu0
        %v1003 = vadd.f32 0.0, %v1002
        %v1004 = vpop.f32.mrf.mxu0
        %1005 = vmatprep.mubr.f32.mxu0 0.0
        %1006 = vmatmul.mubr.f32.gmra.mxu0 %v805
        %v1007 = vpop.f32.mrf.mxu0
        %v1008 = vadd.f32 0.0, %v1007
        %v1009 = vpop.f32.mrf.mxu0
        %1010 = vmatprep.mubr.f32.mxu0 0.0
        %1011 = vmatmul.mubr.f32.gmra.mxu0 %v806
        %v1012 = vpop.f32.mrf.mxu0
        %v1013 = vadd.f32 0.0, %v1012
        %v1014 = vpop.f32.mrf.mxu0
        %1015 = vmatprep.mubr.f32.mxu0 0.0
        %1016 = vmatmul.mubr.f32.gmra.mxu0 %v807
        %v1017 = vpop.f32.mrf.mxu0
        %v1018 = vadd.f32 0.0, %v1017
        %v1019 = vpop.f32.mrf.mxu0
        %1020 = vmatprep.mubr.f32.mxu0 0.0
        %1021 = vmatmul.mubr.f32.gmra.mxu0 %v808
        %v1022 = vpop.f32.mrf.mxu0
        %v1023 = vadd.f32 0.0, %v1022
        %v1024 = vpop.f32.mrf.mxu0
        %1025 = vmatprep.mubr.f32.mxu0 0.0
        %1026 = vmatmul.mubr.f32.gmra.mxu0 %v809
        %v1027 = vpop.f32.mrf.mxu0
        %v1028 = vadd.f32 0.0, %v1027
        %v1029 = vpop.f32.mrf.mxu0
        %1030 = vmatprep.mubr.f32.mxu0 0.0
        %1031 = vmatmul.mubr.f32.gmra.mxu0 %v810
        %v1032 = vpop.f32.mrf.mxu0
        %v1033 = vadd.f32 0.0, %v1032
        %v1034 = vpop.f32.mrf.mxu0
        %1035 = vmatprep.mubr.f32.mxu0 0.0
        %1036 = vmatmul.mubr.f32.gmra.mxu0 %v811
        %v1037 = vpop.f32.mrf.mxu0
        %v1038 = vadd.f32 0.0, %v1037
        %v1039 = vpop.f32.mrf.mxu0
        %1040 = vmatprep.mubr.f32.mxu0 0.0
        %1041 = vmatmul.mubr.f32.gmra.mxu0 %v812
        %v1042 = vpop.f32.mrf.mxu0
        %v1043 = vadd.f32 0.0, %v1042
        %v1044 = vpop.f32.mrf.mxu0
        %1045 = vmatprep.mubr.f32.mxu0 0.0
        %1046 = vmatmul.mubr.f32.gmra.mxu0 %v813
        %v1047 = vpop.f32.mrf.mxu0
        %v1048 = vadd.f32 0.0, %v1047
        %v1049 = vpop.f32.mrf.mxu0
        %1050 = vmatprep.mubr.f32.mxu0 0.0
        %1051 = vmatmul.mubr.f32.gmra.mxu0 %v814
        %v1052 = vpop.f32.mrf.mxu0
        %v1053 = vadd.f32 0.0, %v1052
        %v1054 = vpop.f32.mrf.mxu0
        %1055 = vdwg.mxu0
        %v1056 = vpack.c.bf16 %v983, %v978
        %v1057 = vpack.c.bf16 %v993, %v988
        %v1058 = vpack.c.bf16 %v1003, %v998
        %v1059 = vpack.c.bf16 %v1013, %v1008
        %v1060 = vpack.c.bf16 %v1023, %v1018
        %v1061 = vpack.c.bf16 %v1033, %v1028
        %v1062 = vpack.c.bf16 %v1043, %v1038
        %v1063 = vpack.c.bf16 %v1053, %v1048
        %v1072 = vunpack.c.l.b16 %v1056
        %v1073 = vunpack.c.h.b16 %v1056
        %v1074 = vunpack.c.l.b16 %v1057
        %v1075 = vunpack.c.h.b16 %v1057
        %v1076 = vunpack.c.l.b16 %v1058
        %v1077 = vunpack.c.h.b16 %v1058
        %v1078 = vunpack.c.l.b16 %v1059
        %v1079 = vunpack.c.h.b16 %v1059
        %v1080 = vunpack.c.l.b16 %v1060
        %v1081 = vunpack.c.h.b16 %v1060
        %v1082 = vunpack.c.l.b16 %v1061
        %v1083 = vunpack.c.h.b16 %v1061
        %v1084 = vunpack.c.l.b16 %v1062
        %v1085 = vunpack.c.h.b16 %v1062
        %v1086 = vunpack.c.l.b16 %v1063
        %v1087 = vunpack.c.h.b16 %v1063
        %v1088 = vpack.c.b16 %v1072, %v1072
        %v1089 = vpack.c.b16 %v1073, %v1073
        %v1090 = vpack.c.b16 %v1074, %v1074
        %v1091 = vpack.c.b16 %v1075, %v1075
        %v1092 = vpack.c.b16 %v1076, %v1076
        %v1093 = vpack.c.b16 %v1077, %v1077
        %v1094 = vpack.c.b16 %v1078, %v1078
        %v1095 = vpack.c.b16 %v1079, %v1079
        %v1096 = vpack.c.b16 %v1080, %v1080
        %v1097 = vpack.c.b16 %v1081, %v1081
        %v1098 = vpack.c.b16 %v1082, %v1082
        %v1099 = vpack.c.b16 %v1083, %v1083
        %v1100 = vpack.c.b16 %v1084, %v1084
        %v1101 = vpack.c.b16 %v1085, %v1085
        %v1102 = vpack.c.b16 %v1086, %v1086
        %v1103 = vpack.c.b16 %v1087, %v1087
        %1120 = vst [vmem:[%s419] sm:$0xf] %v1088
        %1121 = vst [vmem:[%s419 + $0x4] sm:$0xf] %v1089
        %1122 = vst [vmem:[%s419 + $0x8] sm:$0xf] %v1090
        %1123 = vst [vmem:[%s419 + $0xc] sm:$0xf] %v1091
        %1124 = vst [vmem:[%s419 + $0x10] sm:$0xf] %v1092
        %1125 = vst [vmem:[%s419 + $0x14] sm:$0xf] %v1093
        %1126 = vst [vmem:[%s419 + $0x18] sm:$0xf] %v1094
        %1127 = vst [vmem:[%s419 + $0x1c] sm:$0xf] %v1095
        %1128 = vst [vmem:[%s419 + $0x20] sm:$0xf] %v1096
        %1129 = vst [vmem:[%s419 + $0x24] sm:$0xf] %v1097
        %1130 = vst [vmem:[%s419 + $0x28] sm:$0xf] %v1098
        %1131 = vst [vmem:[%s419 + $0x2c] sm:$0xf] %v1099
        %1132 = vst [vmem:[%s419 + $0x30] sm:$0xf] %v1100
        %1133 = vst [vmem:[%s419 + $0x34] sm:$0xf] %v1101
        %1134 = vst [vmem:[%s419 + $0x38] sm:$0xf] %v1102
        %1135 = vst [vmem:[%s419 + $0x3c] sm:$0xf] %v1103
        %v1136 = vld [vmem:[#allocation10] sm:$0xff]
        %v1137 = vld [vmem:[#allocation10 + $0x8] sm:$0xff]
        %v1138 = vld [vmem:[#allocation10 + $0x10] sm:$0xff]
        %v1139 = vld [vmem:[#allocation10 + $0x18] sm:$0xff]
        %v1140 = vld [vmem:[#allocation10 + $0x20] sm:$0xff]
        %v1141 = vld [vmem:[#allocation10 + $0x28] sm:$0xff]
        %v1142 = vld [vmem:[#allocation10 + $0x30] sm:$0xff]
        %v1143 = vld [vmem:[#allocation10 + $0x38] sm:$0xff]
        %v1144 = vld [vmem:[#allocation10 + $0x40] sm:$0xff]
        %v1145 = vld [vmem:[#allocation10 + $0x48] sm:$0xff]
        %v1146 = vld [vmem:[#allocation10 + $0x50] sm:$0xff]
        %v1147 = vld [vmem:[#allocation10 + $0x58] sm:$0xff]
        %v1148 = vld [vmem:[#allocation10 + $0x60] sm:$0xff]
        %v1149 = vld [vmem:[#allocation10 + $0x68] sm:$0xff]
        %v1150 = vld [vmem:[#allocation10 + $0x70] sm:$0xff]
        %v1151 = vld [vmem:[#allocation10 + $0x78] sm:$0xff]
        %1152 = vmatprep.subr.mxu0 0.0
        %1153 = vmatpush1.msra.mxu0 %v1151
        %1154 = vmatprep.subr.mxu0 0.0
        %1155 = vmatpush1.msra.mxu0 %v1150
        %1156 = vmatprep.subr.mxu0 0.0
        %1157 = vmatpush1.msra.mxu0 %v1149
        %1158 = vmatprep.subr.mxu0 0.0
        %1159 = vmatpush1.msra.mxu0 %v1148
        %1160 = vmatprep.subr.mxu0 0.0
        %1161 = vmatpush1.msra.mxu0 %v1147
        %1162 = vmatprep.subr.mxu0 0.0
        %1163 = vmatpush1.msra.mxu0 %v1146
        %1164 = vmatprep.subr.mxu0 0.0
        %1165 = vmatpush1.msra.mxu0 %v1145
        %1166 = vmatprep.subr.mxu0 0.0
        %1167 = vmatpush1.msra.mxu0 %v1144
        %1168 = vmatprep.subr.mxu0 0.0
        %1169 = vmatpush1.msra.mxu0 %v1143
        %1170 = vmatprep.subr.mxu0 0.0
        %1171 = vmatpush1.msra.mxu0 %v1142
        %1172 = vmatprep.subr.mxu0 0.0
        %1173 = vmatpush1.msra.mxu0 %v1141
        %1174 = vmatprep.subr.mxu0 0.0
        %1175 = vmatpush1.msra.mxu0 %v1140
        %1176 = vmatprep.subr.mxu0 0.0
        %1177 = vmatpush1.msra.mxu0 %v1139
        %1178 = vmatprep.subr.mxu0 0.0
        %1179 = vmatpush1.msra.mxu0 %v1138
        %1180 = vmatprep.subr.mxu0 0.0
        %1181 = vmatpush1.msra.mxu0 %v1137
        %1182 = vmatprep.subr.mxu0 0.0
        %1183 = vmatpush1.msra.mxu0 %v1136
        %1184 = vmatprep.subr.mxu0 0.0
        %1185 = vmatpush2.msra.mxu0 0.0
        %1186 = vmatprep.subr.mxu0 0.0
        %1187 = vmatpush2.msra.mxu0 0.0
        %1188 = vmatprep.subr.mxu0 0.0
        %1189 = vmatpush2.msra.mxu0 0.0
        %1190 = vmatprep.subr.mxu0 0.0
        %1191 = vmatpush2.msra.mxu0 0.0
        %1192 = vmatprep.subr.mxu0 0.0
        %1193 = vmatpush2.msra.mxu0 0.0
        %1194 = vmatprep.subr.mxu0 0.0
        %1195 = vmatpush2.msra.mxu0 0.0
        %1196 = vmatprep.subr.mxu0 0.0
        %1197 = vmatpush2.msra.mxu0 0.0
        %1198 = vmatprep.subr.mxu0 0.0
        %1199 = vmatpush2.msra.mxu0 0.0
        %1200 = vmatprep.subr.mxu0 0.0
        %1201 = vmatpush2.msra.mxu0 0.0
        %1202 = vmatprep.subr.mxu0 0.0
        %1203 = vmatpush2.msra.mxu0 0.0
        %1204 = vmatprep.subr.mxu0 0.0
        %1205 = vmatpush2.msra.mxu0 0.0
        %1206 = vmatprep.subr.mxu0 0.0
        %1207 = vmatpush2.msra.mxu0 0.0
        %1208 = vmatprep.subr.mxu0 0.0
        %1209 = vmatpush2.msra.mxu0 0.0
        %1210 = vmatprep.subr.mxu0 0.0
        %1211 = vmatpush2.msra.mxu0 0.0
        %1212 = vmatprep.subr.mxu0 0.0
        %1213 = vmatpush2.msra.mxu0 0.0
        %1214 = vmatprep.subr.mxu0 0.0
        %1215 = vmatpush2.msra.mxu0 0.0
        %1216 = vmatprep.mubr.f32.mxu0 0.0
        %1217 = vmatmul.mubr.f32.gmra.mxu0 %v799
        %v1218 = vpop.f32.mrf.mxu0
        %v1219 = vadd.f32 0.0, %v1218
        %v1220 = vpop.f32.mrf.mxu0
        %1221 = vmatprep.mubr.f32.mxu0 0.0
        %1222 = vmatmul.mubr.f32.gmra.mxu0 %v800
        %v1223 = vpop.f32.mrf.mxu0
        %v1224 = vadd.f32 0.0, %v1223
        %v1225 = vpop.f32.mrf.mxu0
        %1226 = vmatprep.mubr.f32.mxu0 0.0
        %1227 = vmatmul.mubr.f32.gmra.mxu0 %v801
        %v1228 = vpop.f32.mrf.mxu0
        %v1229 = vadd.f32 0.0, %v1228
        %v1230 = vpop.f32.mrf.mxu0
        %1231 = vmatprep.mubr.f32.mxu0 0.0
        %1232 = vmatmul.mubr.f32.gmra.mxu0 %v802
        %v1233 = vpop.f32.mrf.mxu0
        %v1234 = vadd.f32 0.0, %v1233
        %v1235 = vpop.f32.mrf.mxu0
        %1236 = vmatprep.mubr.f32.mxu0 0.0
        %1237 = vmatmul.mubr.f32.gmra.mxu0 %v803
        %v1238 = vpop.f32.mrf.mxu0
        %v1239 = vadd.f32 0.0, %v1238
        %v1240 = vpop.f32.mrf.mxu0
        %1241 = vmatprep.mubr.f32.mxu0 0.0
        %1242 = vmatmul.mubr.f32.gmra.mxu0 %v804
        %v1243 = vpop.f32.mrf.mxu0
        %v1244 = vadd.f32 0.0, %v1243
        %v1245 = vpop.f32.mrf.mxu0
        %1246 = vmatprep.mubr.f32.mxu0 0.0
        %1247 = vmatmul.mubr.f32.gmra.mxu0 %v805
        %v1248 = vpop.f32.mrf.mxu0
        %v1249 = vadd.f32 0.0, %v1248
        %v1250 = vpop.f32.mrf.mxu0
        %1251 = vmatprep.mubr.f32.mxu0 0.0
        %1252 = vmatmul.mubr.f32.gmra.mxu0 %v806
        %v1253 = vpop.f32.mrf.mxu0
        %v1254 = vadd.f32 0.0, %v1253
        %v1255 = vpop.f32.mrf.mxu0
        %1256 = vmatprep.mubr.f32.mxu0 0.0
        %1257 = vmatmul.mubr.f32.gmra.mxu0 %v807
        %v1258 = vpop.f32.mrf.mxu0
        %v1259 = vadd.f32 0.0, %v1258
        %v1260 = vpop.f32.mrf.mxu0
        %1261 = vmatprep.mubr.f32.mxu0 0.0
        %1262 = vmatmul.mubr.f32.gmra.mxu0 %v808
        %v1263 = vpop.f32.mrf.mxu0
        %v1264 = vadd.f32 0.0, %v1263
        %v1265 = vpop.f32.mrf.mxu0
        %1266 = vmatprep.mubr.f32.mxu0 0.0
        %1267 = vmatmul.mubr.f32.gmra.mxu0 %v809
        %v1268 = vpop.f32.mrf.mxu0
        %v1269 = vadd.f32 0.0, %v1268
        %v1270 = vpop.f32.mrf.mxu0
        %1271 = vmatprep.mubr.f32.mxu0 0.0
        %1272 = vmatmul.mubr.f32.gmra.mxu0 %v810
        %v1273 = vpop.f32.mrf.mxu0
        %v1274 = vadd.f32 0.0, %v1273
        %v1275 = vpop.f32.mrf.mxu0
        %1276 = vmatprep.mubr.f32.mxu0 0.0
        %1277 = vmatmul.mubr.f32.gmra.mxu0 %v811
        %v1278 = vpop.f32.mrf.mxu0
        %v1279 = vadd.f32 0.0, %v1278
        %v1280 = vpop.f32.mrf.mxu0
        %1281 = vmatprep.mubr.f32.mxu0 0.0
        %1282 = vmatmul.mubr.f32.gmra.mxu0 %v812
        %v1283 = vpop.f32.mrf.mxu0
        %v1284 = vadd.f32 0.0, %v1283
        %v1285 = vpop.f32.mrf.mxu0
        %1286 = vmatprep.mubr.f32.mxu0 0.0
        %1287 = vmatmul.mubr.f32.gmra.mxu0 %v813
        %v1288 = vpop.f32.mrf.mxu0
        %v1289 = vadd.f32 0.0, %v1288
        %v1290 = vpop.f32.mrf.mxu0
        %1291 = vmatprep.mubr.f32.mxu0 0.0
        %1292 = vmatmul.mubr.f32.gmra.mxu0 %v814
        %v1293 = vpop.f32.mrf.mxu0
        %v1294 = vadd.f32 0.0, %v1293
        %v1295 = vpop.f32.mrf.mxu0
        %1296 = vdwg.mxu0
        %v1297 = vpack.c.bf16 %v1224, %v1219
        %v1298 = vpack.c.bf16 %v1234, %v1229
        %v1299 = vpack.c.bf16 %v1244, %v1239
        %v1300 = vpack.c.bf16 %v1254, %v1249
        %v1301 = vpack.c.bf16 %v1264, %v1259
        %v1302 = vpack.c.bf16 %v1274, %v1269
        %v1303 = vpack.c.bf16 %v1284, %v1279
        %v1304 = vpack.c.bf16 %v1294, %v1289
        %v1313 = vunpack.c.l.b16 %v1297
        %v1314 = vunpack.c.h.b16 %v1297
        %v1315 = vunpack.c.l.b16 %v1298
        %v1316 = vunpack.c.h.b16 %v1298
        %v1317 = vunpack.c.l.b16 %v1299
        %v1318 = vunpack.c.h.b16 %v1299
        %v1319 = vunpack.c.l.b16 %v1300
        %v1320 = vunpack.c.h.b16 %v1300
        %v1321 = vunpack.c.l.b16 %v1301
        %v1322 = vunpack.c.h.b16 %v1301
        %v1323 = vunpack.c.l.b16 %v1302
        %v1324 = vunpack.c.h.b16 %v1302
        %v1325 = vunpack.c.l.b16 %v1303
        %v1326 = vunpack.c.h.b16 %v1303
        %v1327 = vunpack.c.l.b16 %v1304
        %v1328 = vunpack.c.h.b16 %v1304
        %v1329 = vpack.c.b16 %v1313, %v1313
        %v1330 = vpack.c.b16 %v1314, %v1314
        %v1331 = vpack.c.b16 %v1315, %v1315
        %v1332 = vpack.c.b16 %v1316, %v1316
        %v1333 = vpack.c.b16 %v1317, %v1317
        %v1334 = vpack.c.b16 %v1318, %v1318
        %v1335 = vpack.c.b16 %v1319, %v1319
        %v1336 = vpack.c.b16 %v1320, %v1320
        %v1337 = vpack.c.b16 %v1321, %v1321
        %v1338 = vpack.c.b16 %v1322, %v1322
        %v1339 = vpack.c.b16 %v1323, %v1323
        %v1340 = vpack.c.b16 %v1324, %v1324
        %v1341 = vpack.c.b16 %v1325, %v1325
        %v1342 = vpack.c.b16 %v1326, %v1326
        %v1343 = vpack.c.b16 %v1327, %v1327
        %v1344 = vpack.c.b16 %v1328, %v1328
        %1361 = vst [vmem:[%s426] sm:$0xf] %v1329
        %1362 = vst [vmem:[%s426 + $0x4] sm:$0xf] %v1330
        %1363 = vst [vmem:[%s426 + $0x8] sm:$0xf] %v1331
        %1364 = vst [vmem:[%s426 + $0xc] sm:$0xf] %v1332
        %1365 = vst [vmem:[%s426 + $0x10] sm:$0xf] %v1333
        %1366 = vst [vmem:[%s426 + $0x14] sm:$0xf] %v1334
        %1367 = vst [vmem:[%s426 + $0x18] sm:$0xf] %v1335
        %1368 = vst [vmem:[%s426 + $0x1c] sm:$0xf] %v1336
        %1369 = vst [vmem:[%s426 + $0x20] sm:$0xf] %v1337
        %1370 = vst [vmem:[%s426 + $0x24] sm:$0xf] %v1338
        %1371 = vst [vmem:[%s426 + $0x28] sm:$0xf] %v1339
        %1372 = vst [vmem:[%s426 + $0x2c] sm:$0xf] %v1340
        %1373 = vst [vmem:[%s426 + $0x30] sm:$0xf] %v1341
        %1374 = vst [vmem:[%s426 + $0x34] sm:$0xf] %v1342
        %1375 = vst [vmem:[%s426 + $0x38] sm:$0xf] %v1343
        %1376 = vst [vmem:[%s426 + $0x3c] sm:$0xf] %v1344
        %s1377 = sand.u32 %s192, 1
        %s1378 = scalar_lea.sflag [#allocation4], %s1377
        %s1379 = sand.u32 %s192, 1
        %s1380 = smul.addr %s1379, 64
        %s1381 = scalar_lea.vmem [#allocation11], %s1380
        %s1382 = sand.u32 %s32, 1
        %s1383 = scalar_lea.sflag [#allocation13], %s1382
        %s1384 = sand.u32 %s218, 1
        %s1385 = smul.addr %s1384, 64
        %s1386 = scalar_lea.vmem [#allocation12], %s1385
        %s1387 = sand.u32 %s32, 1
        %s1388 = scalar_lea.sflag [#allocation13], %s1387
        %s1389 = sand.u32 %s244, 1
        %s1390 = smul.addr %s1389, 64
        %s1391 = scalar_lea.vmem [#allocation14], %s1390
        // Predicated region
        $region69: #{tpu_custom_call.1} parent=47 // pred_check
          %p1392 = pneg %p202
        $region70: #{tpu_custom_call.1} parent=47 // pred_check_branch
          %1394 = sbr.rel (%p1392) target = $region72
        $region71: #{tpu_custom_call.1} parent=47 // pred_region
          %s1395 = smul.u32 16, %s32
          %s1397 = ssub.s32 1024, 1024
          %1398 = vsyncadd %s1378, %s1397
          %s1399 = smul.addr %s1395, 64
          %s1400 = scalar_lea.hbm %s7, %s1399
          %s1401 = sshll.u32 %s1381, 4
          %s1402 = int_to_ptr.vmem [resolvable:$true] %s1401
          %1407 = dma.vmem_to_hbm [thread:$0]  %s1402, 1024, %s1400, %s1378, 64, 64, 4
        $region72: #{tpu_custom_call.1} parent=47 // pred_fallthru
          _
        // Predicated region
        $region73: #{tpu_custom_call.1} parent=47 // pred_check
          %p1408 = pneg %p228
        $region74: #{tpu_custom_call.1} parent=47 // pred_check_branch
          %1410 = sbr.rel (%p1408) target = $region76
        $region75: #{tpu_custom_call.1} parent=47 // pred_region
          %s1411 = smul.u32 16, %s32
          %s1413 = ssub.s32 1024, 1024
          %1414 = vsyncadd %s1383, %s1413
          %s1415 = smul.addr %s1411, 64
          %s1416 = scalar_lea.hbm %s8, %s1415
          %s1417 = sshll.u32 %s1386, 4
          %s1418 = int_to_ptr.vmem [resolvable:$true] %s1417
          %1423 = dma.vmem_to_hbm [thread:$0]  %s1418, 1024, %s1416, %s1383, 64, 64, 4
        $region76: #{tpu_custom_call.1} parent=47 // pred_fallthru
          _
        // Predicated region
        $region77: #{tpu_custom_call.1} parent=47 // pred_check
          %p1424 = pneg %p254
        $region78: #{tpu_custom_call.1} parent=47 // pred_check_branch
          %1426 = sbr.rel (%p1424) target = $region80
        $region79: #{tpu_custom_call.1} parent=47 // pred_region
          %s1427 = smul.u32 16, %s32
          %s1429 = ssub.s32 1024, 1024
          %1430 = vsyncadd %s1388, %s1429
          %s1431 = smul.addr %s1427, 64
          %s1432 = scalar_lea.hbm %s9, %s1431
          %s1433 = sshll.u32 %s1391, 4
          %s1434 = int_to_ptr.vmem [resolvable:$true] %s1433
          %1439 = dma.vmem_to_hbm [thread:$0]  %s1434, 1024, %s1432, %s1388, 64, 64, 4
        $region80: #{tpu_custom_call.1} parent=47 // pred_fallthru
          _
      $region48: #{tpu_custom_call.1} parent=5 // pred_fallthru
        _
      %p1440 = scmp.le.s32.totalorder 2, %s27
      // Predicated region
      $region81: #{tpu_custom_call.1} parent=5 // pred_check
        %p1441 = pneg %p1440
      $region82: #{tpu_custom_call.1} parent=5 // pred_check_branch
        %1443 = sbr.rel (%p1441) target = $region84
      $region83: #{tpu_custom_call.1} parent=5 // pred_region
        %s1444 = ssub.s32 %s27, 2
        // Predicated region
        $region85: #{tpu_custom_call.1} parent=83 // pred_check
          %p1445 = pneg %p208
        $region86: #{tpu_custom_call.1} parent=83 // pred_check_branch
          %1447 = sbr.rel (%p1445) target = $region88
        $region87: #{tpu_custom_call.1} parent=83 // pred_region
          %s1448 = sand.u32 %s193, 1
          %s1449 = scalar_lea.sflag [#allocation4], %s1448
          %s1450 = sand.u32 %s193, 1
          %s1451 = smul.addr %s1450, 64
          %s1452 = scalar_lea.vmem [#allocation11], %s1451
          %1453 = dma.done %s1449, 1024
        $region88: #{tpu_custom_call.1} parent=83 // pred_fallthru
          _
        // Predicated region
        $region89: #{tpu_custom_call.1} parent=83 // pred_check
          %p1454 = pneg %p234
        $region90: #{tpu_custom_call.1} parent=83 // pred_check_branch
          %1456 = sbr.rel (%p1454) target = $region92
        $region91: #{tpu_custom_call.1} parent=83 // pred_region
          %s1457 = sand.u32 %s33, 1
          %s1458 = scalar_lea.sflag [#allocation13], %s1457
          %s1459 = sand.u32 %s219, 1
          %s1460 = smul.addr %s1459, 64
          %s1461 = scalar_lea.vmem [#allocation12], %s1460
          %1462 = dma.done %s1458, 1024
        $region92: #{tpu_custom_call.1} parent=83 // pred_fallthru
          _
        // Predicated region
        $region93: #{tpu_custom_call.1} parent=83 // pred_check
          %p1463 = pneg %p260
        $region94: #{tpu_custom_call.1} parent=83 // pred_check_branch
          %1465 = sbr.rel (%p1463) target = $region96
        $region95: #{tpu_custom_call.1} parent=83 // pred_region
          %s1466 = sand.u32 %s33, 1
          %s1467 = scalar_lea.sflag [#allocation13], %s1466
          %s1468 = sand.u32 %s245, 1
          %s1469 = smul.addr %s1468, 64
          %s1470 = scalar_lea.vmem [#allocation14], %s1469
          %1471 = dma.done %s1467, 1024
        $region96: #{tpu_custom_call.1} parent=83 // pred_fallthru
          _
      $region84: #{tpu_custom_call.1} parent=5 // pred_fallthru
        _
    $region6: #{tpu_custom_call.1} parent=1 // loop_footer
      %s31 = sadd.s32 1, %s27
    $region7: #{tpu_custom_call.1} parent=1 // loop_footer_branch
      %26 = sbr.rel target = $region3
    $region8: #{tpu_custom_call.1} parent=1 // loop_exit
      _
    %1472 = vsyncpa [#allocation3], 1
    %s1473 = scalar_lea.sflag [#allocation3], 1
    %1474 = vsyncpa %s1473, 1
    %1475 = vsyncpa [#allocation6], 1
    %1476 = vsyncpa [#allocation9], 1
    %1477 = vsyncpa [#allocation4], 1
    %s1478 = scalar_lea.sflag [#allocation4], 1
    %1479 = vsyncpa %s1478, 1
    %1480 = vsyncpa [#allocation13], 1
    %s1481 = scalar_lea.sflag [#allocation13], 1
    %1482 = vsyncpa %s1481, 1

</llo_original>
